<compile_context>
chip_gen: v7x
topology: tpu7x:2x2x1
jax: 0.10.0
libtpu: 0.0.40
codegen_flags: <defaults>
</compile_context>

<pallas_src>
import functools

import jax
import jax.numpy as jnp
from jax.experimental import pallas as pl
from jax.experimental.pallas import tpu as pltpu


def _spatial_attention_kernel(x_ref, w_ref, o_ref, pad_ref, *, C, H, W, KS, G):
    """Fused channel mean/max -> zero-padded KSxKS conv (2->1 ch) -> sigmoid.

    x_ref:   (G, C, H, W)           VMEM  G lane-packed batch images
    w_ref:   (2*KS*KS,)             SMEM  conv weight, flattened (cin, kh, kw)
    o_ref:   (G, 1, H, W)           VMEM
    pad_ref: (2, H+2P, G*(W+2P))    VMEM  packed zero-padded avg/max planes
    """
    P = KS // 2
    Hp = H + 2 * P
    Ws = W + 2 * P                       # per-image slot width (conv pad incl.)
    f32 = jnp.float32

    # Hoisted zero slab (broadcasts are not CSE'd if rebuilt inside loops).
    zero_slot = jnp.zeros((Hp, Ws), f32)

    # ---- 1. plane-wise channel mean / max, per packed image -----------------
    for g in range(G):
        s = x_ref[g, 0].astype(f32)      # (H, W): one plane at a time
        m = s
        for c in range(1, C):
            p = x_ref[g, c].astype(f32)
            s = s + p
            m = jnp.maximum(m, p)
        avg = s * (1.0 / C)

        # Rebuild the whole slot each step: zero the (small) slot, then store
        # the interior.  Slot g's zero columns are also the padding between
        # neighbouring images, so conv windows never read another image's data.
        for cp, plane in ((0, avg), (1, m)):
            pad_ref[cp, :, g * Ws:(g + 1) * Ws] = zero_slot
            pad_ref[cp, P:P + H, g * Ws + P:g * Ws + P + W] = plane

    # ---- 2. KSxKS conv (2 -> 1 channel) over the packed planes ---------------
    # 2*KS row-plane loads; each of the KS lane shifts is a static-offset window
    # of the in-register row-plane (an XLU lane rotate), scaled by an SMEM
    # scalar weight on the VPU.  All G images are convolved simultaneously.
    Wacc = G * Ws - 2 * P                # packed accumulator width
    acc = None
    for cp in range(2):
        for i in range(KS):
            row = pad_ref[cp, i:i + H, :]                # (H, G*Ws) one load
            for j in range(KS):
                wv = w_ref[cp * KS * KS + i * KS + j]    # SMEM scalar
                term = wv * row[:, j:j + Wacc]
                acc = term if acc is None else acc + term

    attn = jax.nn.sigmoid(acc)           # (H, Wacc)

    # ---- 3. unpack each image's (H, W) attention map -------------------------
    for g in range(G):
        o_ref[g, 0, :, :] = attn[:, g * Ws:g * Ws + W].astype(o_ref.dtype)


def spatial_attention(x, weight, *, kernel_size=7):
    """x: (B, C, H, W); weight: (1, 2, KS, KS) (PyTorch Conv2d layout, no bias).

    Returns sigmoid(conv2d(cat([mean_c(x), max_c(x)], 1), weight, pad=KS//2)),
    shape (B, 1, H, W).
    """
    B, C, H, W = x.shape
    KS = kernel_size
    assert KS in (3, 7), "kernel size must be 3 or 7"
    assert weight.shape == (1, 2, KS, KS)
    P = KS // 2
    Ws = W + 2 * P

    # Lane packing factor: as many images as fit in the 128-lane vreg width,
    # restricted to a divisor of B so the grid is exact.
    lane_budget = max(1, 128 // Ws)
    G = 1
    for g in range(min(B, lane_budget), 0, -1):
        if B % g == 0:
            G = g
            break

    w_flat = weight.astype(jnp.float32).reshape(-1)       # (2*KS*KS,)

    kern = functools.partial(_spatial_attention_kernel,
                             C=C, H=H, W=W, KS=KS, G=G)

    # Explicit VMEM budget: double-buffered in/out blocks + scratch, with slack.
    itemsize = x.dtype.itemsize
    in_block = 2 * G * C * H * W * itemsize
    out_block = 2 * G * 1 * H * W * itemsize
    scratch = 2 * (H + 2 * P) * G * Ws * 4
    vmem_limit = int(min(64 * 1024 * 1024,
                         max(32 * 1024 * 1024,
                             2 * (in_block + out_block + scratch))))

    return pl.pallas_call(
        kern,
        out_shape=jax.ShapeDtypeStruct((B, 1, H, W), x.dtype),
        grid=(B // G,),
        in_specs=[
            pl.BlockSpec((G, C, H, W), lambda b: (b, 0, 0, 0)),
            pl.BlockSpec(memory_space=pltpu.MemorySpace.SMEM),   # conv weights
        ],
        out_specs=pl.BlockSpec((G, 1, H, W), lambda b: (b, 0, 0, 0)),
        scratch_shapes=[pltpu.VMEM((2, H + 2 * P, G * Ws), jnp.float32)],
        compiler_params=pltpu.CompilerParams(
            dimension_semantics=("parallel",),
            vmem_limit_bytes=vmem_limit),
    )(x, w_flat)


if __name__ == "__main__":
    key = jax.random.PRNGKey(0)
    kx, kw = jax.random.split(key)

    B, C, H, W = 2, 4, 16, 16
    KS = 7
    x = jax.random.normal(kx, (B, C, H, W), jnp.float32)
    # Conv2d(2, 1, 7, padding=3, bias=False) weight (Cout, Cin, kh, kw).
    weight = 0.1 * jax.random.normal(kw, (1, 2, KS, KS), jnp.float32)

    out = spatial_attention(x, weight, kernel_size=KS)
    out = jax.block_until_ready(out)
    assert out.shape == (B, 1, H, W), out.shape

    # Pure-JAX reference (same semantics as the PyTorch module).
    avg = jnp.mean(x, axis=1, keepdims=True)
    mx = jnp.max(x, axis=1, keepdims=True)
    attn_in = jnp.concatenate([avg, mx], axis=1)           # (B, 2, H, W)
    ref = jax.lax.conv_general_dilated(
        attn_in, weight, window_strides=(1, 1),
        padding=[(KS // 2, KS // 2), (KS // 2, KS // 2)],
        dimension_numbers=("NCHW", "OIHW", "NCHW"))
    ref = jax.nn.sigmoid(ref)
    assert jnp.allclose(out, ref, atol=1e-4, rtol=1e-4), \
        float(jnp.max(jnp.abs(out - ref)))

    print("KERNEL_OK")
</pallas_src>

<mosaic_0001>
module attributes {stable_mosaic.version = 11 : i64} {
  func.func @_spatial_attention_kernel(%arg0: i32, %arg1: memref<2x4x16x16xf32, #tpu.memory_space<vmem>>, %arg2: memref<98xf32, #tpu.memory_space<smem>>, %arg3: memref<2x1x16x16xf32, #tpu.memory_space<vmem>>, %arg4: memref<2x22x44xf32, #tpu.memory_space<vmem>>) attributes {dimension_semantics = [#tpu.dimension_semantics<parallel>], iteration_bounds = array<i64: 1>, scalar_prefetch = 0 : i64, scratch_operands = 1 : i64, tpu.core_type = #tpu.core_type<tc>, window_params = [{transform_indices = @transform_0, window_bounds = array<i64: 2, 4, 16, 16>}, {transform_indices = @transform_1, window_bounds = array<i64: 98>}, {transform_indices = @transform_2, window_bounds = array<i64: 2, 1, 16, 16>}]} {
    %cst = arith.constant 0.000000e+00 : f32
    %0 = vector.broadcast %cst : f32 to vector<22x22xf32>
    %c0 = arith.constant 0 : index
    %c0_0 = arith.constant 0 : index
    %c0_1 = arith.constant 0 : index
    %c0_2 = arith.constant 0 : index
    %1 = vector.load %arg1[%c0, %c0_0, %c0_1, %c0_2] : memref<2x4x16x16xf32, #tpu.memory_space<vmem>>, vector<1x1x16x16xf32>
    %2 = vector.shape_cast %1 : vector<1x1x16x16xf32> to vector<16x16xf32>
    %c0_3 = arith.constant 0 : index
    %c1 = arith.constant 1 : index
    %c0_4 = arith.constant 0 : index
    %c0_5 = arith.constant 0 : index
    %3 = vector.load %arg1[%c0_3, %c1, %c0_4, %c0_5] : memref<2x4x16x16xf32, #tpu.memory_space<vmem>>, vector<1x1x16x16xf32>
    %4 = vector.shape_cast %3 : vector<1x1x16x16xf32> to vector<16x16xf32>
    %5 = arith.addf %2, %4 : vector<16x16xf32>
    %6 = arith.maximumf %2, %4 : vector<16x16xf32>
    %c0_6 = arith.constant 0 : index
    %c2 = arith.constant 2 : index
    %c0_7 = arith.constant 0 : index
    %c0_8 = arith.constant 0 : index
    %7 = vector.load %arg1[%c0_6, %c2, %c0_7, %c0_8] : memref<2x4x16x16xf32, #tpu.memory_space<vmem>>, vector<1x1x16x16xf32>
    %8 = vector.shape_cast %7 : vector<1x1x16x16xf32> to vector<16x16xf32>
    %9 = arith.addf %5, %8 : vector<16x16xf32>
    %10 = arith.maximumf %6, %8 : vector<16x16xf32>
    %c0_9 = arith.constant 0 : index
    %c3 = arith.constant 3 : index
    %c0_10 = arith.constant 0 : index
    %c0_11 = arith.constant 0 : index
    %11 = vector.load %arg1[%c0_9, %c3, %c0_10, %c0_11] : memref<2x4x16x16xf32, #tpu.memory_space<vmem>>, vector<1x1x16x16xf32>
    %12 = vector.shape_cast %11 : vector<1x1x16x16xf32> to vector<16x16xf32>
    %13 = arith.addf %9, %12 : vector<16x16xf32>
    %14 = arith.maximumf %10, %12 : vector<16x16xf32>
    %cst_12 = arith.constant 2.500000e-01 : f32
    %15 = vector.broadcast %cst_12 : f32 to vector<16x16xf32>
    %16 = arith.mulf %13, %15 : vector<16x16xf32>
    %c0_13 = arith.constant 0 : index
    %c0_14 = arith.constant 0 : index
    %c0_15 = arith.constant 0 : index
    %17 = vector.load %arg4[%c0_13, %c0_14, %c0_15] : memref<2x22x44xf32, #tpu.memory_space<vmem>>, vector<1x22x22xf32>
    %18 = vector.shape_cast %17 : vector<1x22x22xf32> to vector<22x22xf32>
    %19 = vector.shape_cast %0 : vector<22x22xf32> to vector<1x22x22xf32>
    tpu.vector_store %arg4[%c0_13, %c0_14, %c0_15], %19 {strides = array<i32>} : memref<2x22x44xf32, #tpu.memory_space<vmem>>, vector<1x22x22xf32>,
    %c0_16 = arith.constant 0 : index
    %c3_17 = arith.constant 3 : index
    %c3_18 = arith.constant 3 : index
    %20 = vector.load %arg4[%c0_16, %c3_17, %c3_18] : memref<2x22x44xf32, #tpu.memory_space<vmem>>, vector<1x16x16xf32>
    %21 = vector.shape_cast %20 : vector<1x16x16xf32> to vector<16x16xf32>
    %22 = vector.shape_cast %16 : vector<16x16xf32> to vector<1x16x16xf32>
    tpu.vector_store %arg4[%c0_16, %c3_17, %c3_18], %22 {strides = array<i32>} : memref<2x22x44xf32, #tpu.memory_space<vmem>>, vector<1x16x16xf32>,
    %c1_19 = arith.constant 1 : index
    %c0_20 = arith.constant 0 : index
    %c0_21 = arith.constant 0 : index
    %23 = vector.load %arg4[%c1_19, %c0_20, %c0_21] : memref<2x22x44xf32, #tpu.memory_space<vmem>>, vector<1x22x22xf32>
    %24 = vector.shape_cast %23 : vector<1x22x22xf32> to vector<22x22xf32>
    %25 = vector.shape_cast %0 : vector<22x22xf32> to vector<1x22x22xf32>
    tpu.vector_store %arg4[%c1_19, %c0_20, %c0_21], %25 {strides = array<i32>} : memref<2x22x44xf32, #tpu.memory_space<vmem>>, vector<1x22x22xf32>,
    %c1_22 = arith.constant 1 : index
    %c3_23 = arith.constant 3 : index
    %c3_24 = arith.constant 3 : index
    %26 = vector.load %arg4[%c1_22, %c3_23, %c3_24] : memref<2x22x44xf32, #tpu.memory_space<vmem>>, vector<1x16x16xf32>
    %27 = vector.shape_cast %26 : vector<1x16x16xf32> to vector<16x16xf32>
    %28 = vector.shape_cast %14 : vector<16x16xf32> to vector<1x16x16xf32>
    tpu.vector_store %arg4[%c1_22, %c3_23, %c3_24], %28 {strides = array<i32>} : memref<2x22x44xf32, #tpu.memory_space<vmem>>, vector<1x16x16xf32>,
    %c1_25 = arith.constant 1 : index
    %c0_26 = arith.constant 0 : index
    %c0_27 = arith.constant 0 : index
    %c0_28 = arith.constant 0 : index
    %29 = vector.load %arg1[%c1_25, %c0_26, %c0_27, %c0_28] : memref<2x4x16x16xf32, #tpu.memory_space<vmem>>, vector<1x1x16x16xf32>
    %30 = vector.shape_cast %29 : vector<1x1x16x16xf32> to vector<16x16xf32>
    %c1_29 = arith.constant 1 : index
    %c1_30 = arith.constant 1 : index
    %c0_31 = arith.constant 0 : index
    %c0_32 = arith.constant 0 : index
    %31 = vector.load %arg1[%c1_29, %c1_30, %c0_31, %c0_32] : memref<2x4x16x16xf32, #tpu.memory_space<vmem>>, vector<1x1x16x16xf32>
    %32 = vector.shape_cast %31 : vector<1x1x16x16xf32> to vector<16x16xf32>
    %33 = arith.addf %30, %32 : vector<16x16xf32>
    %34 = arith.maximumf %30, %32 : vector<16x16xf32>
    %c1_33 = arith.constant 1 : index
    %c2_34 = arith.constant 2 : index
    %c0_35 = arith.constant 0 : index
    %c0_36 = arith.constant 0 : index
    %35 = vector.load %arg1[%c1_33, %c2_34, %c0_35, %c0_36] : memref<2x4x16x16xf32, #tpu.memory_space<vmem>>, vector<1x1x16x16xf32>
    %36 = vector.shape_cast %35 : vector<1x1x16x16xf32> to vector<16x16xf32>
    %37 = arith.addf %33, %36 : vector<16x16xf32>
    %38 = arith.maximumf %34, %36 : vector<16x16xf32>
    %c1_37 = arith.constant 1 : index
    %c3_38 = arith.constant 3 : index
    %c0_39 = arith.constant 0 : index
    %c0_40 = arith.constant 0 : index
    %39 = vector.load %arg1[%c1_37, %c3_38, %c0_39, %c0_40] : memref<2x4x16x16xf32, #tpu.memory_space<vmem>>, vector<1x1x16x16xf32>
    %40 = vector.shape_cast %39 : vector<1x1x16x16xf32> to vector<16x16xf32>
    %41 = arith.addf %37, %40 : vector<16x16xf32>
    %42 = arith.maximumf %38, %40 : vector<16x16xf32>
    %cst_41 = arith.constant 2.500000e-01 : f32
    %43 = vector.broadcast %cst_41 : f32 to vector<16x16xf32>
    %44 = arith.mulf %41, %43 : vector<16x16xf32>
    %c0_42 = arith.constant 0 : index
    %c0_43 = arith.constant 0 : index
    %c22 = arith.constant 22 : index
    %45 = vector.load %arg4[%c0_42, %c0_43, %c22] : memref<2x22x44xf32, #tpu.memory_space<vmem>>, vector<1x22x22xf32>
    %46 = vector.shape_cast %45 : vector<1x22x22xf32> to vector<22x22xf32>
    %47 = vector.shape_cast %0 : vector<22x22xf32> to vector<1x22x22xf32>
    tpu.vector_store %arg4[%c0_42, %c0_43, %c22], %47 {strides = array<i32>} : memref<2x22x44xf32, #tpu.memory_space<vmem>>, vector<1x22x22xf32>,
    %c0_44 = arith.constant 0 : index
    %c3_45 = arith.constant 3 : index
    %c25 = arith.constant 25 : index
    %48 = vector.load %arg4[%c0_44, %c3_45, %c25] : memref<2x22x44xf32, #tpu.memory_space<vmem>>, vector<1x16x16xf32>
    %49 = vector.shape_cast %48 : vector<1x16x16xf32> to vector<16x16xf32>
    %50 = vector.shape_cast %44 : vector<16x16xf32> to vector<1x16x16xf32>
    tpu.vector_store %arg4[%c0_44, %c3_45, %c25], %50 {strides = array<i32>} : memref<2x22x44xf32, #tpu.memory_space<vmem>>, vector<1x16x16xf32>,
    %c1_46 = arith.constant 1 : index
    %c0_47 = arith.constant 0 : index
    %c22_48 = arith.constant 22 : index
    %51 = vector.load %arg4[%c1_46, %c0_47, %c22_48] : memref<2x22x44xf32, #tpu.memory_space<vmem>>, vector<1x22x22xf32>
    %52 = vector.shape_cast %51 : vector<1x22x22xf32> to vector<22x22xf32>
    %53 = vector.shape_cast %0 : vector<22x22xf32> to vector<1x22x22xf32>
    tpu.vector_store %arg4[%c1_46, %c0_47, %c22_48], %53 {strides = array<i32>} : memref<2x22x44xf32, #tpu.memory_space<vmem>>, vector<1x22x22xf32>,
    %c1_49 = arith.constant 1 : index
    %c3_50 = arith.constant 3 : index
    %c25_51 = arith.constant 25 : index
    %54 = vector.load %arg4[%c1_49, %c3_50, %c25_51] : memref<2x22x44xf32, #tpu.memory_space<vmem>>, vector<1x16x16xf32>
    %55 = vector.shape_cast %54 : vector<1x16x16xf32> to vector<16x16xf32>
    %56 = vector.shape_cast %42 : vector<16x16xf32> to vector<1x16x16xf32>
    tpu.vector_store %arg4[%c1_49, %c3_50, %c25_51], %56 {strides = array<i32>} : memref<2x22x44xf32, #tpu.memory_space<vmem>>, vector<1x16x16xf32>,
    %c0_52 = arith.constant 0 : index
    %c0_53 = arith.constant 0 : index
    %c0_54 = arith.constant 0 : index
    %57 = vector.load %arg4[%c0_52, %c0_53, %c0_54] : memref<2x22x44xf32, #tpu.memory_space<vmem>>, vector<1x16x44xf32>
    %58 = vector.shape_cast %57 : vector<1x16x44xf32> to vector<16x44xf32>
    %c0_55 = arith.constant 0 : index
    %59 = memref.load %arg2[%c0_55] : memref<98xf32, #tpu.memory_space<smem>>
    %60 = vector.extract_strided_slice %58 {offsets = [0, 0], sizes = [16, 38], strides = [1, 1]} : vector<16x44xf32> to vector<16x38xf32>
    %61 = vector.broadcast %59 : f32 to vector<16x38xf32>
    %62 = arith.mulf %61, %60 : vector<16x38xf32>
    %c1_56 = arith.constant 1 : index
    %63 = memref.load %arg2[%c1_56] : memref<98xf32, #tpu.memory_space<smem>>
    %64 = vector.extract_strided_slice %58 {offsets = [0, 1], sizes = [16, 38], strides = [1, 1]} : vector<16x44xf32> to vector<16x38xf32>
    %65 = vector.broadcast %63 : f32 to vector<16x38xf32>
    %66 = arith.mulf %65, %64 : vector<16x38xf32>
    %67 = arith.addf %62, %66 : vector<16x38xf32>
    %c2_57 = arith.constant 2 : index
    %68 = memref.load %arg2[%c2_57] : memref<98xf32, #tpu.memory_space<smem>>
    %69 = vector.extract_strided_slice %58 {offsets = [0, 2], sizes = [16, 38], strides = [1, 1]} : vector<16x44xf32> to vector<16x38xf32>
    %70 = vector.broadcast %68 : f32 to vector<16x38xf32>
    %71 = arith.mulf %70, %69 : vector<16x38xf32>
    %72 = arith.addf %67, %71 : vector<16x38xf32>
    %c3_58 = arith.constant 3 : index
    %73 = memref.load %arg2[%c3_58] : memref<98xf32, #tpu.memory_space<smem>>
    %74 = vector.extract_strided_slice %58 {offsets = [0, 3], sizes = [16, 38], strides = [1, 1]} : vector<16x44xf32> to vector<16x38xf32>
    %75 = vector.broadcast %73 : f32 to vector<16x38xf32>
    %76 = arith.mulf %75, %74 : vector<16x38xf32>
    %77 = arith.addf %72, %76 : vector<16x38xf32>
    %c4 = arith.constant 4 : index
    %78 = memref.load %arg2[%c4] : memref<98xf32, #tpu.memory_space<smem>>
    %79 = vector.extract_strided_slice %58 {offsets = [0, 4], sizes = [16, 38], strides = [1, 1]} : vector<16x44xf32> to vector<16x38xf32>
    %80 = vector.broadcast %78 : f32 to vector<16x38xf32>
    %81 = arith.mulf %80, %79 : vector<16x38xf32>
    %82 = arith.addf %77, %81 : vector<16x38xf32>
    %c5 = arith.constant 5 : index
    %83 = memref.load %arg2[%c5] : memref<98xf32, #tpu.memory_space<smem>>
    %84 = vector.extract_strided_slice %58 {offsets = [0, 5], sizes = [16, 38], strides = [1, 1]} : vector<16x44xf32> to vector<16x38xf32>
    %85 = vector.broadcast %83 : f32 to vector<16x38xf32>
    %86 = arith.mulf %85, %84 : vector<16x38xf32>
    %87 = arith.addf %82, %86 : vector<16x38xf32>
    %c6 = arith.constant 6 : index
    %88 = memref.load %arg2[%c6] : memref<98xf32, #tpu.memory_space<smem>>
    %89 = vector.extract_strided_slice %58 {offsets = [0, 6], sizes = [16, 38], strides = [1, 1]} : vector<16x44xf32> to vector<16x38xf32>
    %90 = vector.broadcast %88 : f32 to vector<16x38xf32>
    %91 = arith.mulf %90, %89 : vector<16x38xf32>
    %92 = arith.addf %87, %91 : vector<16x38xf32>
    %c0_59 = arith.constant 0 : index
    %c1_60 = arith.constant 1 : index
    %c0_61 = arith.constant 0 : index
    %93 = vector.load %arg4[%c0_59, %c1_60, %c0_61] : memref<2x22x44xf32, #tpu.memory_space<vmem>>, vector<1x16x44xf32>
    %94 = vector.shape_cast %93 : vector<1x16x44xf32> to vector<16x44xf32>
    %c7 = arith.constant 7 : index
    %95 = memref.load %arg2[%c7] : memref<98xf32, #tpu.memory_space<smem>>
    %96 = vector.extract_strided_slice %94 {offsets = [0, 0], sizes = [16, 38], strides = [1, 1]} : vector<16x44xf32> to vector<16x38xf32>
    %97 = vector.broadcast %95 : f32 to vector<16x38xf32>
    %98 = arith.mulf %97, %96 : vector<16x38xf32>
    %99 = arith.addf %92, %98 : vector<16x38xf32>
    %c8 = arith.constant 8 : index
    %100 = memref.load %arg2[%c8] : memref<98xf32, #tpu.memory_space<smem>>
    %101 = vector.extract_strided_slice %94 {offsets = [0, 1], sizes = [16, 38], strides = [1, 1]} : vector<16x44xf32> to vector<16x38xf32>
    %102 = vector.broadcast %100 : f32 to vector<16x38xf32>
    %103 = arith.mulf %102, %101 : vector<16x38xf32>
    %104 = arith.addf %99, %103 : vector<16x38xf32>
    %c9 = arith.constant 9 : index
    %105 = memref.load %arg2[%c9] : memref<98xf32, #tpu.memory_space<smem>>
    %106 = vector.extract_strided_slice %94 {offsets = [0, 2], sizes = [16, 38], strides = [1, 1]} : vector<16x44xf32> to vector<16x38xf32>
    %107 = vector.broadcast %105 : f32 to vector<16x38xf32>
    %108 = arith.mulf %107, %106 : vector<16x38xf32>
    %109 = arith.addf %104, %108 : vector<16x38xf32>
    %c10 = arith.constant 10 : index
    %110 = memref.load %arg2[%c10] : memref<98xf32, #tpu.memory_space<smem>>
    %111 = vector.extract_strided_slice %94 {offsets = [0, 3], sizes = [16, 38], strides = [1, 1]} : vector<16x44xf32> to vector<16x38xf32>
    %112 = vector.broadcast %110 : f32 to vector<16x38xf32>
    %113 = arith.mulf %112, %111 : vector<16x38xf32>
    %114 = arith.addf %109, %113 : vector<16x38xf32>
    %c11 = arith.constant 11 : index
    %115 = memref.load %arg2[%c11] : memref<98xf32, #tpu.memory_space<smem>>
    %116 = vector.extract_strided_slice %94 {offsets = [0, 4], sizes = [16, 38], strides = [1, 1]} : vector<16x44xf32> to vector<16x38xf32>
    %117 = vector.broadcast %115 : f32 to vector<16x38xf32>
    %118 = arith.mulf %117, %116 : vector<16x38xf32>
    %119 = arith.addf %114, %118 : vector<16x38xf32>
    %c12 = arith.constant 12 : index
    %120 = memref.load %arg2[%c12] : memref<98xf32, #tpu.memory_space<smem>>
    %121 = vector.extract_strided_slice %94 {offsets = [0, 5], sizes = [16, 38], strides = [1, 1]} : vector<16x44xf32> to vector<16x38xf32>
    %122 = vector.broadcast %120 : f32 to vector<16x38xf32>
    %123 = arith.mulf %122, %121 : vector<16x38xf32>
    %124 = arith.addf %119, %123 : vector<16x38xf32>
    %c13 = arith.constant 13 : index
    %125 = memref.load %arg2[%c13] : memref<98xf32, #tpu.memory_space<smem>>
    %126 = vector.extract_strided_slice %94 {offsets = [0, 6], sizes = [16, 38], strides = [1, 1]} : vector<16x44xf32> to vector<16x38xf32>
    %127 = vector.broadcast %125 : f32 to vector<16x38xf32>
    %128 = arith.mulf %127, %126 : vector<16x38xf32>
    %129 = arith.addf %124, %128 : vector<16x38xf32>
    %c0_62 = arith.constant 0 : index
    %c2_63 = arith.constant 2 : index
    %c0_64 = arith.constant 0 : index
    %130 = vector.load %arg4[%c0_62, %c2_63, %c0_64] : memref<2x22x44xf32, #tpu.memory_space<vmem>>, vector<1x16x44xf32>
    %131 = vector.shape_cast %130 : vector<1x16x44xf32> to vector<16x44xf32>
    %c14 = arith.constant 14 : index
    %132 = memref.load %arg2[%c14] : memref<98xf32, #tpu.memory_space<smem>>
    %133 = vector.extract_strided_slice %131 {offsets = [0, 0], sizes = [16, 38], strides = [1, 1]} : vector<16x44xf32> to vector<16x38xf32>
    %134 = vector.broadcast %132 : f32 to vector<16x38xf32>
    %135 = arith.mulf %134, %133 : vector<16x38xf32>
    %136 = arith.addf %129, %135 : vector<16x38xf32>
    %c15 = arith.constant 15 : index
    %137 = memref.load %arg2[%c15] : memref<98xf32, #tpu.memory_space<smem>>
    %138 = vector.extract_strided_slice %131 {offsets = [0, 1], sizes = [16, 38], strides = [1, 1]} : vector<16x44xf32> to vector<16x38xf32>
    %139 = vector.broadcast %137 : f32 to vector<16x38xf32>
    %140 = arith.mulf %139, %138 : vector<16x38xf32>
    %141 = arith.addf %136, %140 : vector<16x38xf32>
    %c16 = arith.constant 16 : index
    %142 = memref.load %arg2[%c16] : memref<98xf32, #tpu.memory_space<smem>>
    %143 = vector.extract_strided_slice %131 {offsets = [0, 2], sizes = [16, 38], strides = [1, 1]} : vector<16x44xf32> to vector<16x38xf32>
    %144 = vector.broadcast %142 : f32 to vector<16x38xf32>
    %145 = arith.mulf %144, %143 : vector<16x38xf32>
    %146 = arith.addf %141, %145 : vector<16x38xf32>
    %c17 = arith.constant 17 : index
    %147 = memref.load %arg2[%c17] : memref<98xf32, #tpu.memory_space<smem>>
    %148 = vector.extract_strided_slice %131 {offsets = [0, 3], sizes = [16, 38], strides = [1, 1]} : vector<16x44xf32> to vector<16x38xf32>
    %149 = vector.broadcast %147 : f32 to vector<16x38xf32>
    %150 = arith.mulf %149, %148 : vector<16x38xf32>
    %151 = arith.addf %146, %150 : vector<16x38xf32>
    %c18 = arith.constant 18 : index
    %152 = memref.load %arg2[%c18] : memref<98xf32, #tpu.memory_space<smem>>
    %153 = vector.extract_strided_slice %131 {offsets = [0, 4], sizes = [16, 38], strides = [1, 1]} : vector<16x44xf32> to vector<16x38xf32>
    %154 = vector.broadcast %152 : f32 to vector<16x38xf32>
    %155 = arith.mulf %154, %153 : vector<16x38xf32>
    %156 = arith.addf %151, %155 : vector<16x38xf32>
    %c19 = arith.constant 19 : index
    %157 = memref.load %arg2[%c19] : memref<98xf32, #tpu.memory_space<smem>>
    %158 = vector.extract_strided_slice %131 {offsets = [0, 5], sizes = [16, 38], strides = [1, 1]} : vector<16x44xf32> to vector<16x38xf32>
    %159 = vector.broadcast %157 : f32 to vector<16x38xf32>
    %160 = arith.mulf %159, %158 : vector<16x38xf32>
    %161 = arith.addf %156, %160 : vector<16x38xf32>
    %c20 = arith.constant 20 : index
    %162 = memref.load %arg2[%c20] : memref<98xf32, #tpu.memory_space<smem>>
    %163 = vector.extract_strided_slice %131 {offsets = [0, 6], sizes = [16, 38], strides = [1, 1]} : vector<16x44xf32> to vector<16x38xf32>
    %164 = vector.broadcast %162 : f32 to vector<16x38xf32>
    %165 = arith.mulf %164, %163 : vector<16x38xf32>
    %166 = arith.addf %161, %165 : vector<16x38xf32>
    %c0_65 = arith.constant 0 : index
    %c3_66 = arith.constant 3 : index
    %c0_67 = arith.constant 0 : index
    %167 = vector.load %arg4[%c0_65, %c3_66, %c0_67] : memref<2x22x44xf32, #tpu.memory_space<vmem>>, vector<1x16x44xf32>
    %168 = vector.shape_cast %167 : vector<1x16x44xf32> to vector<16x44xf32>
    %c21 = arith.constant 21 : index
    %169 = memref.load %arg2[%c21] : memref<98xf32, #tpu.memory_space<smem>>
    %170 = vector.extract_strided_slice %168 {offsets = [0, 0], sizes = [16, 38], strides = [1, 1]} : vector<16x44xf32> to vector<16x38xf32>
    %171 = vector.broadcast %169 : f32 to vector<16x38xf32>
    %172 = arith.mulf %171, %170 : vector<16x38xf32>
    %173 = arith.addf %166, %172 : vector<16x38xf32>
    %c22_68 = arith.constant 22 : index
    %174 = memref.load %arg2[%c22_68] : memref<98xf32, #tpu.memory_space<smem>>
    %175 = vector.extract_strided_slice %168 {offsets = [0, 1], sizes = [16, 38], strides = [1, 1]} : vector<16x44xf32> to vector<16x38xf32>
    %176 = vector.broadcast %174 : f32 to vector<16x38xf32>
    %177 = arith.mulf %176, %175 : vector<16x38xf32>
    %178 = arith.addf %173, %177 : vector<16x38xf32>
    %c23 = arith.constant 23 : index
    %179 = memref.load %arg2[%c23] : memref<98xf32, #tpu.memory_space<smem>>
    %180 = vector.extract_strided_slice %168 {offsets = [0, 2], sizes = [16, 38], strides = [1, 1]} : vector<16x44xf32> to vector<16x38xf32>
    %181 = vector.broadcast %179 : f32 to vector<16x38xf32>
    %182 = arith.mulf %181, %180 : vector<16x38xf32>
    %183 = arith.addf %178, %182 : vector<16x38xf32>
    %c24 = arith.constant 24 : index
    %184 = memref.load %arg2[%c24] : memref<98xf32, #tpu.memory_space<smem>>
    %185 = vector.extract_strided_slice %168 {offsets = [0, 3], sizes = [16, 38], strides = [1, 1]} : vector<16x44xf32> to vector<16x38xf32>
    %186 = vector.broadcast %184 : f32 to vector<16x38xf32>
    %187 = arith.mulf %186, %185 : vector<16x38xf32>
    %188 = arith.addf %183, %187 : vector<16x38xf32>
    %c25_69 = arith.constant 25 : index
    %189 = memref.load %arg2[%c25_69] : memref<98xf32, #tpu.memory_space<smem>>
    %190 = vector.extract_strided_slice %168 {offsets = [0, 4], sizes = [16, 38], strides = [1, 1]} : vector<16x44xf32> to vector<16x38xf32>
    %191 = vector.broadcast %189 : f32 to vector<16x38xf32>
    %192 = arith.mulf %191, %190 : vector<16x38xf32>
    %193 = arith.addf %188, %192 : vector<16x38xf32>
    %c26 = arith.constant 26 : index
    %194 = memref.load %arg2[%c26] : memref<98xf32, #tpu.memory_space<smem>>
    %195 = vector.extract_strided_slice %168 {offsets = [0, 5], sizes = [16, 38], strides = [1, 1]} : vector<16x44xf32> to vector<16x38xf32>
    %196 = vector.broadcast %194 : f32 to vector<16x38xf32>
    %197 = arith.mulf %196, %195 : vector<16x38xf32>
    %198 = arith.addf %193, %197 : vector<16x38xf32>
    %c27 = arith.constant 27 : index
    %199 = memref.load %arg2[%c27] : memref<98xf32, #tpu.memory_space<smem>>
    %200 = vector.extract_strided_slice %168 {offsets = [0, 6], sizes = [16, 38], strides = [1, 1]} : vector<16x44xf32> to vector<16x38xf32>
    %201 = vector.broadcast %199 : f32 to vector<16x38xf32>
    %202 = arith.mulf %201, %200 : vector<16x38xf32>
    %203 = arith.addf %198, %202 : vector<16x38xf32>
    %c0_70 = arith.constant 0 : index
    %c4_71 = arith.constant 4 : index
    %c0_72 = arith.constant 0 : index
    %204 = vector.load %arg4[%c0_70, %c4_71, %c0_72] : memref<2x22x44xf32, #tpu.memory_space<vmem>>, vector<1x16x44xf32>
    %205 = vector.shape_cast %204 : vector<1x16x44xf32> to vector<16x44xf32>
    %c28 = arith.constant 28 : index
    %206 = memref.load %arg2[%c28] : memref<98xf32, #tpu.memory_space<smem>>
    %207 = vector.extract_strided_slice %205 {offsets = [0, 0], sizes = [16, 38], strides = [1, 1]} : vector<16x44xf32> to vector<16x38xf32>
    %208 = vector.broadcast %206 : f32 to vector<16x38xf32>
    %209 = arith.mulf %208, %207 : vector<16x38xf32>
    %210 = arith.addf %203, %209 : vector<16x38xf32>
    %c29 = arith.constant 29 : index
    %211 = memref.load %arg2[%c29] : memref<98xf32, #tpu.memory_space<smem>>
    %212 = vector.extract_strided_slice %205 {offsets = [0, 1], sizes = [16, 38], strides = [1, 1]} : vector<16x44xf32> to vector<16x38xf32>
    %213 = vector.broadcast %211 : f32 to vector<16x38xf32>
    %214 = arith.mulf %213, %212 : vector<16x38xf32>
    %215 = arith.addf %210, %214 : vector<16x38xf32>
    %c30 = arith.constant 30 : index
    %216 = memref.load %arg2[%c30] : memref<98xf32, #tpu.memory_space<smem>>
    %217 = vector.extract_strided_slice %205 {offsets = [0, 2], sizes = [16, 38], strides = [1, 1]} : vector<16x44xf32> to vector<16x38xf32>
    %218 = vector.broadcast %216 : f32 to vector<16x38xf32>
    %219 = arith.mulf %218, %217 : vector<16x38xf32>
    %220 = arith.addf %215, %219 : vector<16x38xf32>
    %c31 = arith.constant 31 : index
    %221 = memref.load %arg2[%c31] : memref<98xf32, #tpu.memory_space<smem>>
    %222 = vector.extract_strided_slice %205 {offsets = [0, 3], sizes = [16, 38], strides = [1, 1]} : vector<16x44xf32> to vector<16x38xf32>
    %223 = vector.broadcast %221 : f32 to vector<16x38xf32>
    %224 = arith.mulf %223, %222 : vector<16x38xf32>
    %225 = arith.addf %220, %224 : vector<16x38xf32>
    %c32 = arith.constant 32 : index
    %226 = memref.load %arg2[%c32] : memref<98xf32, #tpu.memory_space<smem>>
    %227 = vector.extract_strided_slice %205 {offsets = [0, 4], sizes = [16, 38], strides = [1, 1]} : vector<16x44xf32> to vector<16x38xf32>
    %228 = vector.broadcast %226 : f32 to vector<16x38xf32>
    %229 = arith.mulf %228, %227 : vector<16x38xf32>
    %230 = arith.addf %225, %229 : vector<16x38xf32>
    %c33 = arith.constant 33 : index
    %231 = memref.load %arg2[%c33] : memref<98xf32, #tpu.memory_space<smem>>
    %232 = vector.extract_strided_slice %205 {offsets = [0, 5], sizes = [16, 38], strides = [1, 1]} : vector<16x44xf32> to vector<16x38xf32>
    %233 = vector.broadcast %231 : f32 to vector<16x38xf32>
    %234 = arith.mulf %233, %232 : vector<16x38xf32>
    %235 = arith.addf %230, %234 : vector<16x38xf32>
    %c34 = arith.constant 34 : index
    %236 = memref.load %arg2[%c34] : memref<98xf32, #tpu.memory_space<smem>>
    %237 = vector.extract_strided_slice %205 {offsets = [0, 6], sizes = [16, 38], strides = [1, 1]} : vector<16x44xf32> to vector<16x38xf32>
    %238 = vector.broadcast %236 : f32 to vector<16x38xf32>
    %239 = arith.mulf %238, %237 : vector<16x38xf32>
    %240 = arith.addf %235, %239 : vector<16x38xf32>
    %c0_73 = arith.constant 0 : index
    %c5_74 = arith.constant 5 : index
    %c0_75 = arith.constant 0 : index
    %241 = vector.load %arg4[%c0_73, %c5_74, %c0_75] : memref<2x22x44xf32, #tpu.memory_space<vmem>>, vector<1x16x44xf32>
    %242 = vector.shape_cast %241 : vector<1x16x44xf32> to vector<16x44xf32>
    %c35 = arith.constant 35 : index
    %243 = memref.load %arg2[%c35] : memref<98xf32, #tpu.memory_space<smem>>
    %244 = vector.extract_strided_slice %242 {offsets = [0, 0], sizes = [16, 38], strides = [1, 1]} : vector<16x44xf32> to vector<16x38xf32>
    %245 = vector.broadcast %243 : f32 to vector<16x38xf32>
    %246 = arith.mulf %245, %244 : vector<16x38xf32>
    %247 = arith.addf %240, %246 : vector<16x38xf32>
    %c36 = arith.constant 36 : index
    %248 = memref.load %arg2[%c36] : memref<98xf32, #tpu.memory_space<smem>>
    %249 = vector.extract_strided_slice %242 {offsets = [0, 1], sizes = [16, 38], strides = [1, 1]} : vector<16x44xf32> to vector<16x38xf32>
    %250 = vector.broadcast %248 : f32 to vector<16x38xf32>
    %251 = arith.mulf %250, %249 : vector<16x38xf32>
    %252 = arith.addf %247, %251 : vector<16x38xf32>
    %c37 = arith.constant 37 : index
    %253 = memref.load %arg2[%c37] : memref<98xf32, #tpu.memory_space<smem>>
    %254 = vector.extract_strided_slice %242 {offsets = [0, 2], sizes = [16, 38], strides = [1, 1]} : vector<16x44xf32> to vector<16x38xf32>
    %255 = vector.broadcast %253 : f32 to vector<16x38xf32>
    %256 = arith.mulf %255, %254 : vector<16x38xf32>
    %257 = arith.addf %252, %256 : vector<16x38xf32>
    %c38 = arith.constant 38 : index
    %258 = memref.load %arg2[%c38] : memref<98xf32, #tpu.memory_space<smem>>
    %259 = vector.extract_strided_slice %242 {offsets = [0, 3], sizes = [16, 38], strides = [1, 1]} : vector<16x44xf32> to vector<16x38xf32>
    %260 = vector.broadcast %258 : f32 to vector<16x38xf32>
    %261 = arith.mulf %260, %259 : vector<16x38xf32>
    %262 = arith.addf %257, %261 : vector<16x38xf32>
    %c39 = arith.constant 39 : index
    %263 = memref.load %arg2[%c39] : memref<98xf32, #tpu.memory_space<smem>>
    %264 = vector.extract_strided_slice %242 {offsets = [0, 4], sizes = [16, 38], strides = [1, 1]} : vector<16x44xf32> to vector<16x38xf32>
    %265 = vector.broadcast %263 : f32 to vector<16x38xf32>
    %266 = arith.mulf %265, %264 : vector<16x38xf32>
    %267 = arith.addf %262, %266 : vector<16x38xf32>
    %c40 = arith.constant 40 : index
    %268 = memref.load %arg2[%c40] : memref<98xf32, #tpu.memory_space<smem>>
    %269 = vector.extract_strided_slice %242 {offsets = [0, 5], sizes = [16, 38], strides = [1, 1]} : vector<16x44xf32> to vector<16x38xf32>
    %270 = vector.broadcast %268 : f32 to vector<16x38xf32>
    %271 = arith.mulf %270, %269 : vector<16x38xf32>
    %272 = arith.addf %267, %271 : vector<16x38xf32>
    %c41 = arith.constant 41 : index
    %273 = memref.load %arg2[%c41] : memref<98xf32, #tpu.memory_space<smem>>
    %274 = vector.extract_strided_slice %242 {offsets = [0, 6], sizes = [16, 38], strides = [1, 1]} : vector<16x44xf32> to vector<16x38xf32>
    %275 = vector.broadcast %273 : f32 to vector<16x38xf32>
    %276 = arith.mulf %275, %274 : vector<16x38xf32>
    %277 = arith.addf %272, %276 : vector<16x38xf32>
    %c0_76 = arith.constant 0 : index
    %c6_77 = arith.constant 6 : index
    %c0_78 = arith.constant 0 : index
    %278 = vector.load %arg4[%c0_76, %c6_77, %c0_78] : memref<2x22x44xf32, #tpu.memory_space<vmem>>, vector<1x16x44xf32>
    %279 = vector.shape_cast %278 : vector<1x16x44xf32> to vector<16x44xf32>
    %c42 = arith.constant 42 : index
    %280 = memref.load %arg2[%c42] : memref<98xf32, #tpu.memory_space<smem>>
    %281 = vector.extract_strided_slice %279 {offsets = [0, 0], sizes = [16, 38], strides = [1, 1]} : vector<16x44xf32> to vector<16x38xf32>
    %282 = vector.broadcast %280 : f32 to vector<16x38xf32>
    %283 = arith.mulf %282, %281 : vector<16x38xf32>
    %284 = arith.addf %277, %283 : vector<16x38xf32>
    %c43 = arith.constant 43 : index
    %285 = memref.load %arg2[%c43] : memref<98xf32, #tpu.memory_space<smem>>
    %286 = vector.extract_strided_slice %279 {offsets = [0, 1], sizes = [16, 38], strides = [1, 1]} : vector<16x44xf32> to vector<16x38xf32>
    %287 = vector.broadcast %285 : f32 to vector<16x38xf32>
    %288 = arith.mulf %287, %286 : vector<16x38xf32>
    %289 = arith.addf %284, %288 : vector<16x38xf32>
    %c44 = arith.constant 44 : index
    %290 = memref.load %arg2[%c44] : memref<98xf32, #tpu.memory_space<smem>>
    %291 = vector.extract_strided_slice %279 {offsets = [0, 2], sizes = [16, 38], strides = [1, 1]} : vector<16x44xf32> to vector<16x38xf32>
    %292 = vector.broadcast %290 : f32 to vector<16x38xf32>
    %293 = arith.mulf %292, %291 : vector<16x38xf32>
    %294 = arith.addf %289, %293 : vector<16x38xf32>
    %c45 = arith.constant 45 : index
    %295 = memref.load %arg2[%c45] : memref<98xf32, #tpu.memory_space<smem>>
    %296 = vector.extract_strided_slice %279 {offsets = [0, 3], sizes = [16, 38], strides = [1, 1]} : vector<16x44xf32> to vector<16x38xf32>
    %297 = vector.broadcast %295 : f32 to vector<16x38xf32>
    %298 = arith.mulf %297, %296 : vector<16x38xf32>
    %299 = arith.addf %294, %298 : vector<16x38xf32>
    %c46 = arith.constant 46 : index
    %300 = memref.load %arg2[%c46] : memref<98xf32, #tpu.memory_space<smem>>
    %301 = vector.extract_strided_slice %279 {offsets = [0, 4], sizes = [16, 38], strides = [1, 1]} : vector<16x44xf32> to vector<16x38xf32>
    %302 = vector.broadcast %300 : f32 to vector<16x38xf32>
    %303 = arith.mulf %302, %301 : vector<16x38xf32>
    %304 = arith.addf %299, %303 : vector<16x38xf32>
    %c47 = arith.constant 47 : index
    %305 = memref.load %arg2[%c47] : memref<98xf32, #tpu.memory_space<smem>>
    %306 = vector.extract_strided_slice %279 {offsets = [0, 5], sizes = [16, 38], strides = [1, 1]} : vector<16x44xf32> to vector<16x38xf32>
    %307 = vector.broadcast %305 : f32 to vector<16x38xf32>
    %308 = arith.mulf %307, %306 : vector<16x38xf32>
    %309 = arith.addf %304, %308 : vector<16x38xf32>
    %c48 = arith.constant 48 : index
    %310 = memref.load %arg2[%c48] : memref<98xf32, #tpu.memory_space<smem>>
    %311 = vector.extract_strided_slice %279 {offsets = [0, 6], sizes = [16, 38], strides = [1, 1]} : vector<16x44xf32> to vector<16x38xf32>
    %312 = vector.broadcast %310 : f32 to vector<16x38xf32>
    %313 = arith.mulf %312, %311 : vector<16x38xf32>
    %314 = arith.addf %309, %313 : vector<16x38xf32>
    %c1_79 = arith.constant 1 : index
    %c0_80 = arith.constant 0 : index
    %c0_81 = arith.constant 0 : index
    %315 = vector.load %arg4[%c1_79, %c0_80, %c0_81] : memref<2x22x44xf32, #tpu.memory_space<vmem>>, vector<1x16x44xf32>
    %316 = vector.shape_cast %315 : vector<1x16x44xf32> to vector<16x44xf32>
    %c49 = arith.constant 49 : index
    %317 = memref.load %arg2[%c49] : memref<98xf32, #tpu.memory_space<smem>>
    %318 = vector.extract_strided_slice %316 {offsets = [0, 0], sizes = [16, 38], strides = [1, 1]} : vector<16x44xf32> to vector<16x38xf32>
    %319 = vector.broadcast %317 : f32 to vector<16x38xf32>
    %320 = arith.mulf %319, %318 : vector<16x38xf32>
    %321 = arith.addf %314, %320 : vector<16x38xf32>
    %c50 = arith.constant 50 : index
    %322 = memref.load %arg2[%c50] : memref<98xf32, #tpu.memory_space<smem>>
    %323 = vector.extract_strided_slice %316 {offsets = [0, 1], sizes = [16, 38], strides = [1, 1]} : vector<16x44xf32> to vector<16x38xf32>
    %324 = vector.broadcast %322 : f32 to vector<16x38xf32>
    %325 = arith.mulf %324, %323 : vector<16x38xf32>
    %326 = arith.addf %321, %325 : vector<16x38xf32>
    %c51 = arith.constant 51 : index
    %327 = memref.load %arg2[%c51] : memref<98xf32, #tpu.memory_space<smem>>
    %328 = vector.extract_strided_slice %316 {offsets = [0, 2], sizes = [16, 38], strides = [1, 1]} : vector<16x44xf32> to vector<16x38xf32>
    %329 = vector.broadcast %327 : f32 to vector<16x38xf32>
    %330 = arith.mulf %329, %328 : vector<16x38xf32>
    %331 = arith.addf %326, %330 : vector<16x38xf32>
    %c52 = arith.constant 52 : index
    %332 = memref.load %arg2[%c52] : memref<98xf32, #tpu.memory_space<smem>>
    %333 = vector.extract_strided_slice %316 {offsets = [0, 3], sizes = [16, 38], strides = [1, 1]} : vector<16x44xf32> to vector<16x38xf32>
    %334 = vector.broadcast %332 : f32 to vector<16x38xf32>
    %335 = arith.mulf %334, %333 : vector<16x38xf32>
    %336 = arith.addf %331, %335 : vector<16x38xf32>
    %c53 = arith.constant 53 : index
    %337 = memref.load %arg2[%c53] : memref<98xf32, #tpu.memory_space<smem>>
    %338 = vector.extract_strided_slice %316 {offsets = [0, 4], sizes = [16, 38], strides = [1, 1]} : vector<16x44xf32> to vector<16x38xf32>
    %339 = vector.broadcast %337 : f32 to vector<16x38xf32>
    %340 = arith.mulf %339, %338 : vector<16x38xf32>
    %341 = arith.addf %336, %340 : vector<16x38xf32>
    %c54 = arith.constant 54 : index
    %342 = memref.load %arg2[%c54] : memref<98xf32, #tpu.memory_space<smem>>
    %343 = vector.extract_strided_slice %316 {offsets = [0, 5], sizes = [16, 38], strides = [1, 1]} : vector<16x44xf32> to vector<16x38xf32>
    %344 = vector.broadcast %342 : f32 to vector<16x38xf32>
    %345 = arith.mulf %344, %343 : vector<16x38xf32>
    %346 = arith.addf %341, %345 : vector<16x38xf32>
    %c55 = arith.constant 55 : index
    %347 = memref.load %arg2[%c55] : memref<98xf32, #tpu.memory_space<smem>>
    %348 = vector.extract_strided_slice %316 {offsets = [0, 6], sizes = [16, 38], strides = [1, 1]} : vector<16x44xf32> to vector<16x38xf32>
    %349 = vector.broadcast %347 : f32 to vector<16x38xf32>
    %350 = arith.mulf %349, %348 : vector<16x38xf32>
    %351 = arith.addf %346, %350 : vector<16x38xf32>
    %c1_82 = arith.constant 1 : index
    %c1_83 = arith.constant 1 : index
    %c0_84 = arith.constant 0 : index
    %352 = vector.load %arg4[%c1_82, %c1_83, %c0_84] : memref<2x22x44xf32, #tpu.memory_space<vmem>>, vector<1x16x44xf32>
    %353 = vector.shape_cast %352 : vector<1x16x44xf32> to vector<16x44xf32>
    %c56 = arith.constant 56 : index
    %354 = memref.load %arg2[%c56] : memref<98xf32, #tpu.memory_space<smem>>
    %355 = vector.extract_strided_slice %353 {offsets = [0, 0], sizes = [16, 38], strides = [1, 1]} : vector<16x44xf32> to vector<16x38xf32>
    %356 = vector.broadcast %354 : f32 to vector<16x38xf32>
    %357 = arith.mulf %356, %355 : vector<16x38xf32>
    %358 = arith.addf %351, %357 : vector<16x38xf32>
    %c57 = arith.constant 57 : index
    %359 = memref.load %arg2[%c57] : memref<98xf32, #tpu.memory_space<smem>>
    %360 = vector.extract_strided_slice %353 {offsets = [0, 1], sizes = [16, 38], strides = [1, 1]} : vector<16x44xf32> to vector<16x38xf32>
    %361 = vector.broadcast %359 : f32 to vector<16x38xf32>
    %362 = arith.mulf %361, %360 : vector<16x38xf32>
    %363 = arith.addf %358, %362 : vector<16x38xf32>
    %c58 = arith.constant 58 : index
    %364 = memref.load %arg2[%c58] : memref<98xf32, #tpu.memory_space<smem>>
    %365 = vector.extract_strided_slice %353 {offsets = [0, 2], sizes = [16, 38], strides = [1, 1]} : vector<16x44xf32> to vector<16x38xf32>
    %366 = vector.broadcast %364 : f32 to vector<16x38xf32>
    %367 = arith.mulf %366, %365 : vector<16x38xf32>
    %368 = arith.addf %363, %367 : vector<16x38xf32>
    %c59 = arith.constant 59 : index
    %369 = memref.load %arg2[%c59] : memref<98xf32, #tpu.memory_space<smem>>
    %370 = vector.extract_strided_slice %353 {offsets = [0, 3], sizes = [16, 38], strides = [1, 1]} : vector<16x44xf32> to vector<16x38xf32>
    %371 = vector.broadcast %369 : f32 to vector<16x38xf32>
    %372 = arith.mulf %371, %370 : vector<16x38xf32>
    %373 = arith.addf %368, %372 : vector<16x38xf32>
    %c60 = arith.constant 60 : index
    %374 = memref.load %arg2[%c60] : memref<98xf32, #tpu.memory_space<smem>>
    %375 = vector.extract_strided_slice %353 {offsets = [0, 4], sizes = [16, 38], strides = [1, 1]} : vector<16x44xf32> to vector<16x38xf32>
    %376 = vector.broadcast %374 : f32 to vector<16x38xf32>
    %377 = arith.mulf %376, %375 : vector<16x38xf32>
    %378 = arith.addf %373, %377 : vector<16x38xf32>
    %c61 = arith.constant 61 : index
    %379 = memref.load %arg2[%c61] : memref<98xf32, #tpu.memory_space<smem>>
    %380 = vector.extract_strided_slice %353 {offsets = [0, 5], sizes = [16, 38], strides = [1, 1]} : vector<16x44xf32> to vector<16x38xf32>
    %381 = vector.broadcast %379 : f32 to vector<16x38xf32>
    %382 = arith.mulf %381, %380 : vector<16x38xf32>
    %383 = arith.addf %378, %382 : vector<16x38xf32>
    %c62 = arith.constant 62 : index
    %384 = memref.load %arg2[%c62] : memref<98xf32, #tpu.memory_space<smem>>
    %385 = vector.extract_strided_slice %353 {offsets = [0, 6], sizes = [16, 38], strides = [1, 1]} : vector<16x44xf32> to vector<16x38xf32>
    %386 = vector.broadcast %384 : f32 to vector<16x38xf32>
    %387 = arith.mulf %386, %385 : vector<16x38xf32>
    %388 = arith.addf %383, %387 : vector<16x38xf32>
    %c1_85 = arith.constant 1 : index
    %c2_86 = arith.constant 2 : index
    %c0_87 = arith.constant 0 : index
    %389 = vector.load %arg4[%c1_85, %c2_86, %c0_87] : memref<2x22x44xf32, #tpu.memory_space<vmem>>, vector<1x16x44xf32>
    %390 = vector.shape_cast %389 : vector<1x16x44xf32> to vector<16x44xf32>
    %c63 = arith.constant 63 : index
    %391 = memref.load %arg2[%c63] : memref<98xf32, #tpu.memory_space<smem>>
    %392 = vector.extract_strided_slice %390 {offsets = [0, 0], sizes = [16, 38], strides = [1, 1]} : vector<16x44xf32> to vector<16x38xf32>
    %393 = vector.broadcast %391 : f32 to vector<16x38xf32>
    %394 = arith.mulf %393, %392 : vector<16x38xf32>
    %395 = arith.addf %388, %394 : vector<16x38xf32>
    %c64 = arith.constant 64 : index
    %396 = memref.load %arg2[%c64] : memref<98xf32, #tpu.memory_space<smem>>
    %397 = vector.extract_strided_slice %390 {offsets = [0, 1], sizes = [16, 38], strides = [1, 1]} : vector<16x44xf32> to vector<16x38xf32>
    %398 = vector.broadcast %396 : f32 to vector<16x38xf32>
    %399 = arith.mulf %398, %397 : vector<16x38xf32>
    %400 = arith.addf %395, %399 : vector<16x38xf32>
    %c65 = arith.constant 65 : index
    %401 = memref.load %arg2[%c65] : memref<98xf32, #tpu.memory_space<smem>>
    %402 = vector.extract_strided_slice %390 {offsets = [0, 2], sizes = [16, 38], strides = [1, 1]} : vector<16x44xf32> to vector<16x38xf32>
    %403 = vector.broadcast %401 : f32 to vector<16x38xf32>
    %404 = arith.mulf %403, %402 : vector<16x38xf32>
    %405 = arith.addf %400, %404 : vector<16x38xf32>
    %c66 = arith.constant 66 : index
    %406 = memref.load %arg2[%c66] : memref<98xf32, #tpu.memory_space<smem>>
    %407 = vector.extract_strided_slice %390 {offsets = [0, 3], sizes = [16, 38], strides = [1, 1]} : vector<16x44xf32> to vector<16x38xf32>
    %408 = vector.broadcast %406 : f32 to vector<16x38xf32>
    %409 = arith.mulf %408, %407 : vector<16x38xf32>
    %410 = arith.addf %405, %409 : vector<16x38xf32>
    %c67 = arith.constant 67 : index
    %411 = memref.load %arg2[%c67] : memref<98xf32, #tpu.memory_space<smem>>
    %412 = vector.extract_strided_slice %390 {offsets = [0, 4], sizes = [16, 38], strides = [1, 1]} : vector<16x44xf32> to vector<16x38xf32>
    %413 = vector.broadcast %411 : f32 to vector<16x38xf32>
    %414 = arith.mulf %413, %412 : vector<16x38xf32>
    %415 = arith.addf %410, %414 : vector<16x38xf32>
    %c68 = arith.constant 68 : index
    %416 = memref.load %arg2[%c68] : memref<98xf32, #tpu.memory_space<smem>>
    %417 = vector.extract_strided_slice %390 {offsets = [0, 5], sizes = [16, 38], strides = [1, 1]} : vector<16x44xf32> to vector<16x38xf32>
    %418 = vector.broadcast %416 : f32 to vector<16x38xf32>
    %419 = arith.mulf %418, %417 : vector<16x38xf32>
    %420 = arith.addf %415, %419 : vector<16x38xf32>
    %c69 = arith.constant 69 : index
    %421 = memref.load %arg2[%c69] : memref<98xf32, #tpu.memory_space<smem>>
    %422 = vector.extract_strided_slice %390 {offsets = [0, 6], sizes = [16, 38], strides = [1, 1]} : vector<16x44xf32> to vector<16x38xf32>
    %423 = vector.broadcast %421 : f32 to vector<16x38xf32>
    %424 = arith.mulf %423, %422 : vector<16x38xf32>
    %425 = arith.addf %420, %424 : vector<16x38xf32>
    %c1_88 = arith.constant 1 : index
    %c3_89 = arith.constant 3 : index
    %c0_90 = arith.constant 0 : index
    %426 = vector.load %arg4[%c1_88, %c3_89, %c0_90] : memref<2x22x44xf32, #tpu.memory_space<vmem>>, vector<1x16x44xf32>
    %427 = vector.shape_cast %426 : vector<1x16x44xf32> to vector<16x44xf32>
    %c70 = arith.constant 70 : index
    %428 = memref.load %arg2[%c70] : memref<98xf32, #tpu.memory_space<smem>>
    %429 = vector.extract_strided_slice %427 {offsets = [0, 0], sizes = [16, 38], strides = [1, 1]} : vector<16x44xf32> to vector<16x38xf32>
    %430 = vector.broadcast %428 : f32 to vector<16x38xf32>
    %431 = arith.mulf %430, %429 : vector<16x38xf32>
    %432 = arith.addf %425, %431 : vector<16x38xf32>
    %c71 = arith.constant 71 : index
    %433 = memref.load %arg2[%c71] : memref<98xf32, #tpu.memory_space<smem>>
    %434 = vector.extract_strided_slice %427 {offsets = [0, 1], sizes = [16, 38], strides = [1, 1]} : vector<16x44xf32> to vector<16x38xf32>
    %435 = vector.broadcast %433 : f32 to vector<16x38xf32>
    %436 = arith.mulf %435, %434 : vector<16x38xf32>
    %437 = arith.addf %432, %436 : vector<16x38xf32>
    %c72 = arith.constant 72 : index
    %438 = memref.load %arg2[%c72] : memref<98xf32, #tpu.memory_space<smem>>
    %439 = vector.extract_strided_slice %427 {offsets = [0, 2], sizes = [16, 38], strides = [1, 1]} : vector<16x44xf32> to vector<16x38xf32>
    %440 = vector.broadcast %438 : f32 to vector<16x38xf32>
    %441 = arith.mulf %440, %439 : vector<16x38xf32>
    %442 = arith.addf %437, %441 : vector<16x38xf32>
    %c73 = arith.constant 73 : index
    %443 = memref.load %arg2[%c73] : memref<98xf32, #tpu.memory_space<smem>>
    %444 = vector.extract_strided_slice %427 {offsets = [0, 3], sizes = [16, 38], strides = [1, 1]} : vector<16x44xf32> to vector<16x38xf32>
    %445 = vector.broadcast %443 : f32 to vector<16x38xf32>
    %446 = arith.mulf %445, %444 : vector<16x38xf32>
    %447 = arith.addf %442, %446 : vector<16x38xf32>
    %c74 = arith.constant 74 : index
    %448 = memref.load %arg2[%c74] : memref<98xf32, #tpu.memory_space<smem>>
    %449 = vector.extract_strided_slice %427 {offsets = [0, 4], sizes = [16, 38], strides = [1, 1]} : vector<16x44xf32> to vector<16x38xf32>
    %450 = vector.broadcast %448 : f32 to vector<16x38xf32>
    %451 = arith.mulf %450, %449 : vector<16x38xf32>
    %452 = arith.addf %447, %451 : vector<16x38xf32>
    %c75 = arith.constant 75 : index
    %453 = memref.load %arg2[%c75] : memref<98xf32, #tpu.memory_space<smem>>
    %454 = vector.extract_strided_slice %427 {offsets = [0, 5], sizes = [16, 38], strides = [1, 1]} : vector<16x44xf32> to vector<16x38xf32>
    %455 = vector.broadcast %453 : f32 to vector<16x38xf32>
    %456 = arith.mulf %455, %454 : vector<16x38xf32>
    %457 = arith.addf %452, %456 : vector<16x38xf32>
    %c76 = arith.constant 76 : index
    %458 = memref.load %arg2[%c76] : memref<98xf32, #tpu.memory_space<smem>>
    %459 = vector.extract_strided_slice %427 {offsets = [0, 6], sizes = [16, 38], strides = [1, 1]} : vector<16x44xf32> to vector<16x38xf32>
    %460 = vector.broadcast %458 : f32 to vector<16x38xf32>
    %461 = arith.mulf %460, %459 : vector<16x38xf32>
    %462 = arith.addf %457, %461 : vector<16x38xf32>
    %c1_91 = arith.constant 1 : index
    %c4_92 = arith.constant 4 : index
    %c0_93 = arith.constant 0 : index
    %463 = vector.load %arg4[%c1_91, %c4_92, %c0_93] : memref<2x22x44xf32, #tpu.memory_space<vmem>>, vector<1x16x44xf32>
    %464 = vector.shape_cast %463 : vector<1x16x44xf32> to vector<16x44xf32>
    %c77 = arith.constant 77 : index
    %465 = memref.load %arg2[%c77] : memref<98xf32, #tpu.memory_space<smem>>
    %466 = vector.extract_strided_slice %464 {offsets = [0, 0], sizes = [16, 38], strides = [1, 1]} : vector<16x44xf32> to vector<16x38xf32>
    %467 = vector.broadcast %465 : f32 to vector<16x38xf32>
    %468 = arith.mulf %467, %466 : vector<16x38xf32>
    %469 = arith.addf %462, %468 : vector<16x38xf32>
    %c78 = arith.constant 78 : index
    %470 = memref.load %arg2[%c78] : memref<98xf32, #tpu.memory_space<smem>>
    %471 = vector.extract_strided_slice %464 {offsets = [0, 1], sizes = [16, 38], strides = [1, 1]} : vector<16x44xf32> to vector<16x38xf32>
    %472 = vector.broadcast %470 : f32 to vector<16x38xf32>
    %473 = arith.mulf %472, %471 : vector<16x38xf32>
    %474 = arith.addf %469, %473 : vector<16x38xf32>
    %c79 = arith.constant 79 : index
    %475 = memref.load %arg2[%c79] : memref<98xf32, #tpu.memory_space<smem>>
    %476 = vector.extract_strided_slice %464 {offsets = [0, 2], sizes = [16, 38], strides = [1, 1]} : vector<16x44xf32> to vector<16x38xf32>
    %477 = vector.broadcast %475 : f32 to vector<16x38xf32>
    %478 = arith.mulf %477, %476 : vector<16x38xf32>
    %479 = arith.addf %474, %478 : vector<16x38xf32>
    %c80 = arith.constant 80 : index
    %480 = memref.load %arg2[%c80] : memref<98xf32, #tpu.memory_space<smem>>
    %481 = vector.extract_strided_slice %464 {offsets = [0, 3], sizes = [16, 38], strides = [1, 1]} : vector<16x44xf32> to vector<16x38xf32>
    %482 = vector.broadcast %480 : f32 to vector<16x38xf32>
    %483 = arith.mulf %482, %481 : vector<16x38xf32>
    %484 = arith.addf %479, %483 : vector<16x38xf32>
    %c81 = arith.constant 81 : index
    %485 = memref.load %arg2[%c81] : memref<98xf32, #tpu.memory_space<smem>>
    %486 = vector.extract_strided_slice %464 {offsets = [0, 4], sizes = [16, 38], strides = [1, 1]} : vector<16x44xf32> to vector<16x38xf32>
    %487 = vector.broadcast %485 : f32 to vector<16x38xf32>
    %488 = arith.mulf %487, %486 : vector<16x38xf32>
    %489 = arith.addf %484, %488 : vector<16x38xf32>
    %c82 = arith.constant 82 : index
    %490 = memref.load %arg2[%c82] : memref<98xf32, #tpu.memory_space<smem>>
    %491 = vector.extract_strided_slice %464 {offsets = [0, 5], sizes = [16, 38], strides = [1, 1]} : vector<16x44xf32> to vector<16x38xf32>
    %492 = vector.broadcast %490 : f32 to vector<16x38xf32>
    %493 = arith.mulf %492, %491 : vector<16x38xf32>
    %494 = arith.addf %489, %493 : vector<16x38xf32>
    %c83 = arith.constant 83 : index
    %495 = memref.load %arg2[%c83] : memref<98xf32, #tpu.memory_space<smem>>
    %496 = vector.extract_strided_slice %464 {offsets = [0, 6], sizes = [16, 38], strides = [1, 1]} : vector<16x44xf32> to vector<16x38xf32>
    %497 = vector.broadcast %495 : f32 to vector<16x38xf32>
    %498 = arith.mulf %497, %496 : vector<16x38xf32>
    %499 = arith.addf %494, %498 : vector<16x38xf32>
    %c1_94 = arith.constant 1 : index
    %c5_95 = arith.constant 5 : index
    %c0_96 = arith.constant 0 : index
    %500 = vector.load %arg4[%c1_94, %c5_95, %c0_96] : memref<2x22x44xf32, #tpu.memory_space<vmem>>, vector<1x16x44xf32>
    %501 = vector.shape_cast %500 : vector<1x16x44xf32> to vector<16x44xf32>
    %c84 = arith.constant 84 : index
    %502 = memref.load %arg2[%c84] : memref<98xf32, #tpu.memory_space<smem>>
    %503 = vector.extract_strided_slice %501 {offsets = [0, 0], sizes = [16, 38], strides = [1, 1]} : vector<16x44xf32> to vector<16x38xf32>
    %504 = vector.broadcast %502 : f32 to vector<16x38xf32>
    %505 = arith.mulf %504, %503 : vector<16x38xf32>
    %506 = arith.addf %499, %505 : vector<16x38xf32>
    %c85 = arith.constant 85 : index
    %507 = memref.load %arg2[%c85] : memref<98xf32, #tpu.memory_space<smem>>
    %508 = vector.extract_strided_slice %501 {offsets = [0, 1], sizes = [16, 38], strides = [1, 1]} : vector<16x44xf32> to vector<16x38xf32>
    %509 = vector.broadcast %507 : f32 to vector<16x38xf32>
    %510 = arith.mulf %509, %508 : vector<16x38xf32>
    %511 = arith.addf %506, %510 : vector<16x38xf32>
    %c86 = arith.constant 86 : index
    %512 = memref.load %arg2[%c86] : memref<98xf32, #tpu.memory_space<smem>>
    %513 = vector.extract_strided_slice %501 {offsets = [0, 2], sizes = [16, 38], strides = [1, 1]} : vector<16x44xf32> to vector<16x38xf32>
    %514 = vector.broadcast %512 : f32 to vector<16x38xf32>
    %515 = arith.mulf %514, %513 : vector<16x38xf32>
    %516 = arith.addf %511, %515 : vector<16x38xf32>
    %c87 = arith.constant 87 : index
    %517 = memref.load %arg2[%c87] : memref<98xf32, #tpu.memory_space<smem>>
    %518 = vector.extract_strided_slice %501 {offsets = [0, 3], sizes = [16, 38], strides = [1, 1]} : vector<16x44xf32> to vector<16x38xf32>
    %519 = vector.broadcast %517 : f32 to vector<16x38xf32>
    %520 = arith.mulf %519, %518 : vector<16x38xf32>
    %521 = arith.addf %516, %520 : vector<16x38xf32>
    %c88 = arith.constant 88 : index
    %522 = memref.load %arg2[%c88] : memref<98xf32, #tpu.memory_space<smem>>
    %523 = vector.extract_strided_slice %501 {offsets = [0, 4], sizes = [16, 38], strides = [1, 1]} : vector<16x44xf32> to vector<16x38xf32>
    %524 = vector.broadcast %522 : f32 to vector<16x38xf32>
    %525 = arith.mulf %524, %523 : vector<16x38xf32>
    %526 = arith.addf %521, %525 : vector<16x38xf32>
    %c89 = arith.constant 89 : index
    %527 = memref.load %arg2[%c89] : memref<98xf32, #tpu.memory_space<smem>>
    %528 = vector.extract_strided_slice %501 {offsets = [0, 5], sizes = [16, 38], strides = [1, 1]} : vector<16x44xf32> to vector<16x38xf32>
    %529 = vector.broadcast %527 : f32 to vector<16x38xf32>
    %530 = arith.mulf %529, %528 : vector<16x38xf32>
    %531 = arith.addf %526, %530 : vector<16x38xf32>
    %c90 = arith.constant 90 : index
    %532 = memref.load %arg2[%c90] : memref<98xf32, #tpu.memory_space<smem>>
    %533 = vector.extract_strided_slice %501 {offsets = [0, 6], sizes = [16, 38], strides = [1, 1]} : vector<16x44xf32> to vector<16x38xf32>
    %534 = vector.broadcast %532 : f32 to vector<16x38xf32>
    %535 = arith.mulf %534, %533 : vector<16x38xf32>
    %536 = arith.addf %531, %535 : vector<16x38xf32>
    %c1_97 = arith.constant 1 : index
    %c6_98 = arith.constant 6 : index
    %c0_99 = arith.constant 0 : index
    %537 = vector.load %arg4[%c1_97, %c6_98, %c0_99] : memref<2x22x44xf32, #tpu.memory_space<vmem>>, vector<1x16x44xf32>
    %538 = vector.shape_cast %537 : vector<1x16x44xf32> to vector<16x44xf32>
    %c91 = arith.constant 91 : index
    %539 = memref.load %arg2[%c91] : memref<98xf32, #tpu.memory_space<smem>>
    %540 = vector.extract_strided_slice %538 {offsets = [0, 0], sizes = [16, 38], strides = [1, 1]} : vector<16x44xf32> to vector<16x38xf32>
    %541 = vector.broadcast %539 : f32 to vector<16x38xf32>
    %542 = arith.mulf %541, %540 : vector<16x38xf32>
    %543 = arith.addf %536, %542 : vector<16x38xf32>
    %c92 = arith.constant 92 : index
    %544 = memref.load %arg2[%c92] : memref<98xf32, #tpu.memory_space<smem>>
    %545 = vector.extract_strided_slice %538 {offsets = [0, 1], sizes = [16, 38], strides = [1, 1]} : vector<16x44xf32> to vector<16x38xf32>
    %546 = vector.broadcast %544 : f32 to vector<16x38xf32>
    %547 = arith.mulf %546, %545 : vector<16x38xf32>
    %548 = arith.addf %543, %547 : vector<16x38xf32>
    %c93 = arith.constant 93 : index
    %549 = memref.load %arg2[%c93] : memref<98xf32, #tpu.memory_space<smem>>
    %550 = vector.extract_strided_slice %538 {offsets = [0, 2], sizes = [16, 38], strides = [1, 1]} : vector<16x44xf32> to vector<16x38xf32>
    %551 = vector.broadcast %549 : f32 to vector<16x38xf32>
    %552 = arith.mulf %551, %550 : vector<16x38xf32>
    %553 = arith.addf %548, %552 : vector<16x38xf32>
    %c94 = arith.constant 94 : index
    %554 = memref.load %arg2[%c94] : memref<98xf32, #tpu.memory_space<smem>>
    %555 = vector.extract_strided_slice %538 {offsets = [0, 3], sizes = [16, 38], strides = [1, 1]} : vector<16x44xf32> to vector<16x38xf32>
    %556 = vector.broadcast %554 : f32 to vector<16x38xf32>
    %557 = arith.mulf %556, %555 : vector<16x38xf32>
    %558 = arith.addf %553, %557 : vector<16x38xf32>
    %c95 = arith.constant 95 : index
    %559 = memref.load %arg2[%c95] : memref<98xf32, #tpu.memory_space<smem>>
    %560 = vector.extract_strided_slice %538 {offsets = [0, 4], sizes = [16, 38], strides = [1, 1]} : vector<16x44xf32> to vector<16x38xf32>
    %561 = vector.broadcast %559 : f32 to vector<16x38xf32>
    %562 = arith.mulf %561, %560 : vector<16x38xf32>
    %563 = arith.addf %558, %562 : vector<16x38xf32>
    %c96 = arith.constant 96 : index
    %564 = memref.load %arg2[%c96] : memref<98xf32, #tpu.memory_space<smem>>
    %565 = vector.extract_strided_slice %538 {offsets = [0, 5], sizes = [16, 38], strides = [1, 1]} : vector<16x44xf32> to vector<16x38xf32>
    %566 = vector.broadcast %564 : f32 to vector<16x38xf32>
    %567 = arith.mulf %566, %565 : vector<16x38xf32>
    %568 = arith.addf %563, %567 : vector<16x38xf32>
    %c97 = arith.constant 97 : index
    %569 = memref.load %arg2[%c97] : memref<98xf32, #tpu.memory_space<smem>>
    %570 = vector.extract_strided_slice %538 {offsets = [0, 6], sizes = [16, 38], strides = [1, 1]} : vector<16x44xf32> to vector<16x38xf32>
    %571 = vector.broadcast %569 : f32 to vector<16x38xf32>
    %572 = arith.mulf %571, %570 : vector<16x38xf32>
    %573 = arith.addf %568, %572 : vector<16x38xf32>
    %574 = arith.negf %573 : vector<16x38xf32>
    %575 = math.exp %574 : vector<16x38xf32>
    %cst_100 = arith.constant 1.000000e+00 : f32
    %576 = vector.broadcast %cst_100 : f32 to vector<16x38xf32>
    %577 = arith.addf %576, %575 : vector<16x38xf32>
    %578 = arith.divf %576, %577 : vector<16x38xf32>
    %579 = vector.extract_strided_slice %578 {offsets = [0, 0], sizes = [16, 16], strides = [1, 1]} : vector<16x38xf32> to vector<16x16xf32>
    %c0_101 = arith.constant 0 : index
    %c0_102 = arith.constant 0 : index
    %c0_103 = arith.constant 0 : index
    %c0_104 = arith.constant 0 : index
    %580 = vector.load %arg3[%c0_101, %c0_102, %c0_103, %c0_104] : memref<2x1x16x16xf32, #tpu.memory_space<vmem>>, vector<1x1x16x16xf32>
    %581 = vector.shape_cast %580 : vector<1x1x16x16xf32> to vector<16x16xf32>
    %582 = vector.shape_cast %579 : vector<16x16xf32> to vector<1x1x16x16xf32>
    tpu.vector_store %arg3[%c0_101, %c0_102, %c0_103, %c0_104], %582 {strides = array<i32>} : memref<2x1x16x16xf32, #tpu.memory_space<vmem>>, vector<1x1x16x16xf32>,
    %583 = vector.extract_strided_slice %578 {offsets = [0, 22], sizes = [16, 16], strides = [1, 1]} : vector<16x38xf32> to vector<16x16xf32>
    %c1_105 = arith.constant 1 : index
    %c0_106 = arith.constant 0 : index
    %c0_107 = arith.constant 0 : index
    %c0_108 = arith.constant 0 : index
    %584 = vector.load %arg3[%c1_105, %c0_106, %c0_107, %c0_108] : memref<2x1x16x16xf32, #tpu.memory_space<vmem>>, vector<1x1x16x16xf32>
    %585 = vector.shape_cast %584 : vector<1x1x16x16xf32> to vector<16x16xf32>
    %586 = vector.shape_cast %583 : vector<16x16xf32> to vector<1x1x16x16xf32>
    tpu.vector_store %arg3[%c1_105, %c0_106, %c0_107, %c0_108], %586 {strides = array<i32>} : memref<2x1x16x16xf32, #tpu.memory_space<vmem>>, vector<1x1x16x16xf32>,
    return
  }
  func.func @transform_0(%arg0: i32) -> (i32, i32, i32, i32) {
    %c0_i32 = arith.constant 0 : i32
    %c0_i32_0 = arith.constant 0 : i32
    %c0_i32_1 = arith.constant 0 : i32
    %c0_i32_2 = arith.constant 0 : i32
    return %arg0, %c0_i32, %c0_i32_0, %c0_i32_1 : i32, i32, i32, i32
  }
  func.func @transform_1(%arg0: i32) -> i32 {
    %c0_i32 = arith.constant 0 : i32
    %c0_i32_0 = arith.constant 0 : i32
    return %c0_i32 : i32
  }
  func.func @transform_2(%arg0: i32) -> (i32, i32, i32, i32) {
    %c0_i32 = arith.constant 0 : i32
    %c0_i32_0 = arith.constant 0 : i32
    %c0_i32_1 = arith.constant 0 : i32
    %c0_i32_2 = arith.constant 0 : i32
    return %arg0, %c0_i32, %c0_i32_0, %c0_i32_1 : i32, i32, i32, i32
  }
}

</mosaic_0001>

<llo_original>
// kernel: tpu_custom_call.1
$region0: #{tpu_custom_call.1}
  #allocation0 [shape = 'u32[]', space=smem, size = 0x4, offset = 0x4, fixed_abs, tag = 'smem constant byte address 0x4 - core index']
  #allocation1 [shape = 'u32[144,128]{1,0:T(1,128)}', space=vmem, size = 0x12000, scoped, tag = 'internal scratch']
  #allocation2 [shape = 'f32[2,22,44]{2,1,0:T(8,128)}', space=vmem, size = 0x6000, scoped, tag = 'scratch operand']
  %s0 = inlined_call_operand.hbm [shape: f32[2,4,16,16], index: 0, kind: input, shape index: {}]
  %s1 = inlined_call_operand.vmem [shape: f32[98], index: 1, kind: input, shape index: {}]
  %s2 = inlined_call_operand.hbm [shape: f32[2,1,16,16], index: 2, kind: output, shape index: {}]
  %s3 = sld [smem:[#allocation0]]
  $region26: #{tpu_custom_call.1} parent=0
    _
  %s5 = ssub.s32 1, %s3
  %s6 = scalar_select 0, %s5, %s3
  $region1: #{tpu_custom_call.1} parent=0
    #allocation3 [shape = 'u8[65536]{0}', space=vmem, size = 0x10000, scoped, tag = 'input window, operand 0, single buffered']
    #allocation4 [shape = 's32[1]{0}', space=sflag, size = 0x4, scoped, tag = 'scoped memory for tpu_custom_call.1']
    #allocation5 [shape = 's32[1]{0}', space=sflag, size = 0x4, scoped, tag = 'scoped memory for tpu_custom_call.1']
    #allocation6 [shape = 's32[1]{0}', space=sflag, size = 0x4, scoped, tag = 'scoped memory for tpu_custom_call.1']
    #allocation7 [shape = 'u8[512]{0}', space=smem, size = 0x200, scoped, tag = 'input window, operand 1, single buffered']
    #allocation8 [shape = 'u8[16384]{0}', space=vmem, size = 0x4000, scoped, tag = 'output window, operand 0, single buffered']
    %7 = vsyncpa [#allocation4], 0
    %8 = vsyncpa [#allocation6], 0
    %9 = vsyncpa [#allocation5], 0
    // Predicated region
    $region2: #{tpu_custom_call.1} parent=1 // pred_check
      _
    $region3: #{tpu_custom_call.1} parent=1 // pred_check_branch
      %11 = sbr.rel (0) target = $region5
    $region4: #{tpu_custom_call.1} parent=1 // pred_region
      %s13 = ssub.s32 2048, 2048
      %14 = vsyncadd [#allocation4], %s13
      %s15 = sshll.u32 [#allocation3], 4
      %s16 = int_to_ptr.vmem [resolvable:$true] %s15
      %21 = dma.hbm_to_vmem [thread:$0]  %s0, 2048, %s16, [#allocation4], 128, 128, 8
    $region5: #{tpu_custom_call.1} parent=1 // pred_fallthru
      _
    // Predicated region
    $region6: #{tpu_custom_call.1} parent=1 // pred_check
      _
    $region7: #{tpu_custom_call.1} parent=1 // pred_check_branch
      %23 = sbr.rel (0) target = $region9
    $region8: #{tpu_custom_call.1} parent=1 // pred_region
      %s25 = ssub.s32 16, 16
      %26 = vsyncadd [#allocation6], %s25
      %s28 = sshll.u32 %s1, 4
      %s29 = int_to_ptr.vmem [resolvable:$true] %s28
      %31 = dma.vmem_to_smem %s29, 16, [#allocation7], [#allocation6]
    $region9: #{tpu_custom_call.1} parent=1 // pred_fallthru
      _
    // Predicated region
    $region10: #{tpu_custom_call.1} parent=1 // pred_check
      _
    $region11: #{tpu_custom_call.1} parent=1 // pred_check_branch
      %33 = sbr.rel (0) target = $region13
    $region12: #{tpu_custom_call.1} parent=1 // pred_region
      %34 = dma.done [#allocation4], 2048
    $region13: #{tpu_custom_call.1} parent=1 // pred_fallthru
      _
    // Predicated region
    $region14: #{tpu_custom_call.1} parent=1 // pred_check
      _
    $region15: #{tpu_custom_call.1} parent=1 // pred_check_branch
      %36 = sbr.rel (0) target = $region17
    $region16: #{tpu_custom_call.1} parent=1 // pred_region
      %37 = dma.done [#allocation6], 16
    $region17: #{tpu_custom_call.1} parent=1 // pred_fallthru
      _
    %38 = sfence
    %v39 = vld [vmem:[#allocation3] sm:$0xff]
    %v40 = vld [vmem:[#allocation3 + $0x8] sm:$0xff]
    %s41 = scalar_lea.vmem [#allocation3], 16
    %v42 = vld [vmem:[%s41] sm:$0xff]
    %v43 = vld [vmem:[%s41 + $0x8] sm:$0xff]
    %v44 = vadd.f32 %v39, %v42
    %v45 = vadd.f32 %v40, %v43
    %v46 = vmax.f32 %v39, %v42
    %v47 = vmax.f32 %v40, %v43
    %s48 = scalar_lea.vmem [#allocation3], 32
    %v49 = vld [vmem:[%s48] sm:$0xff]
    %v50 = vld [vmem:[%s48 + $0x8] sm:$0xff]
    %v51 = vadd.f32 %v44, %v49
    %v52 = vadd.f32 %v45, %v50
    %v53 = vmax.f32 %v46, %v49
    %v54 = vmax.f32 %v47, %v50
    %s55 = scalar_lea.vmem [#allocation3], 48
    %v56 = vld [vmem:[%s55] sm:$0xff]
    %v57 = vld [vmem:[%s55 + $0x8] sm:$0xff]
    %v58 = vadd.f32 %v51, %v56
    %v59 = vadd.f32 %v52, %v57
    %v60 = vmax.f32 %v53, %v56
    %v61 = vmax.f32 %v54, %v57
    %v62 = vmul.f32 %v58, 0.25
    %v63 = vmul.f32 %v59, 0.25
    %vm64 = vcmask 179200
    %65 = vst.msk [vmem:[#allocation2] sm:$0xff] %vm64, 0.0
    %66 = vst.msk [vmem:[#allocation2 + $0x8] sm:$0xff] %vm64, 0.0
    %vm67 = vcmask 177152
    %68 = vst.msk [vmem:[#allocation2 + $0x10] sm:$0x3f] %vm67, 0.0
    %71 = vrot.lane.b32.xlu0 %v62, 3
    %v72 = vpop.permute.xlu0 %71
    %73 = vrot.lane.b32.xlu0 %v63, 3
    %v74 = vpop.permute.xlu0 %73
    %vm77 = vcmask 154648
    %78 = vst.msk [vmem:[#allocation2 + $0x3] sm:$0xff] %vm77, %v72
    %79 = vst.msk [vmem:[#allocation2 + $0xb] sm:$0xff] %vm77, %v74
    %s80 = scalar_lea.vmem [#allocation2], 24
    %81 = vst.msk [vmem:[%s80] sm:$0xff] %vm64, 0.0
    %82 = vst.msk [vmem:[%s80 + $0x8] sm:$0xff] %vm64, 0.0
    %83 = vst.msk [vmem:[%s80 + $0x10] sm:$0x3f] %vm67, 0.0
    %86 = vrot.lane.b32.xlu0 %v60, 3
    %v87 = vpop.permute.xlu0 %86
    %88 = vrot.lane.b32.xlu0 %v61, 3
    %v89 = vpop.permute.xlu0 %88
    %92 = vst.msk [vmem:[%s80 + $0x3] sm:$0xff] %vm77, %v87
    %93 = vst.msk [vmem:[%s80 + $0xb] sm:$0xff] %vm77, %v89
    %s94 = scalar_lea.vmem [#allocation3], 64
    %v95 = vld [vmem:[%s94] sm:$0xff]
    %v96 = vld [vmem:[%s94 + $0x8] sm:$0xff]
    %s97 = scalar_lea.vmem [#allocation3], 80
    %v98 = vld [vmem:[%s97] sm:$0xff]
    %v99 = vld [vmem:[%s97 + $0x8] sm:$0xff]
    %v100 = vadd.f32 %v95, %v98
    %v101 = vadd.f32 %v96, %v99
    %v102 = vmax.f32 %v95, %v98
    %v103 = vmax.f32 %v96, %v99
    %s104 = scalar_lea.vmem [#allocation3], 96
    %v105 = vld [vmem:[%s104] sm:$0xff]
    %v106 = vld [vmem:[%s104 + $0x8] sm:$0xff]
    %v107 = vadd.f32 %v100, %v105
    %v108 = vadd.f32 %v101, %v106
    %v109 = vmax.f32 %v102, %v105
    %v110 = vmax.f32 %v103, %v106
    %s111 = scalar_lea.vmem [#allocation3], 112
    %v112 = vld [vmem:[%s111] sm:$0xff]
    %v113 = vld [vmem:[%s111 + $0x8] sm:$0xff]
    %v114 = vadd.f32 %v107, %v112
    %v115 = vadd.f32 %v108, %v113
    %v116 = vmax.f32 %v109, %v112
    %v117 = vmax.f32 %v110, %v113
    %v118 = vmul.f32 %v114, 0.25
    %v119 = vmul.f32 %v115, 0.25
    %vm120 = vcmask 359600
    %121 = vst.msk [vmem:[#allocation2] sm:$0xff] %vm120, 0.0
    %122 = vst.msk [vmem:[#allocation2 + $0x8] sm:$0xff] %vm120, 0.0
    %vm123 = vcmask 357552
    %124 = vst.msk [vmem:[#allocation2 + $0x10] sm:$0x3f] %vm123, 0.0
    %127 = vrot.lane.b32.xlu0 %v118, 25
    %v128 = vpop.permute.xlu0 %127
    %129 = vrot.lane.b32.xlu0 %v119, 25
    %v130 = vpop.permute.xlu0 %129
    %vm133 = vcmask 335048
    %134 = vst.msk [vmem:[#allocation2 + $0x3] sm:$0xff] %vm133, %v128
    %135 = vst.msk [vmem:[#allocation2 + $0xb] sm:$0xff] %vm133, %v130
    %136 = vst.msk [vmem:[%s80] sm:$0xff] %vm120, 0.0
    %137 = vst.msk [vmem:[%s80 + $0x8] sm:$0xff] %vm120, 0.0
    %138 = vst.msk [vmem:[%s80 + $0x10] sm:$0x3f] %vm123, 0.0
    %141 = vrot.lane.b32.xlu0 %v116, 25
    %v142 = vpop.permute.xlu0 %141
    %143 = vrot.lane.b32.xlu0 %v117, 25
    %v144 = vpop.permute.xlu0 %143
    %147 = vst.msk [vmem:[%s80 + $0x3] sm:$0xff] %vm133, %v142
    %148 = vst.msk [vmem:[%s80 + $0xb] sm:$0xff] %vm133, %v144
    %v149 = vld [vmem:[#allocation2] sm:$0xff]
    %v150 = vld [vmem:[#allocation2 + $0x8] sm:$0xff]
    %s151 = sld [smem:[#allocation7]]
    %v152 = vstv %s151
    %v153 = vmul.f32 %v152, %v149
    %v154 = vmul.f32 %v152, %v150
    %s155 = sld [smem:[#allocation7 + $0x1]]
    %v156 = vstv %s155
    %v157 = vmul.f32 %v156, %v149
    %v158 = vmul.f32 %v156, %v150
    %161 = vrot.lane.b32.xlu0 %v157, 127
    %v162 = vpop.permute.xlu0 %161
    %163 = vrot.lane.b32.xlu0 %v158, 127
    %v164 = vpop.permute.xlu0 %163
    %v167 = vadd.f32 %v153, %v162
    %v168 = vadd.f32 %v154, %v164
    %s169 = sld [smem:[#allocation7 + $0x2]]
    %v170 = vstv %s169
    %v171 = vmul.f32 %v170, %v149
    %v172 = vmul.f32 %v170, %v150
    %175 = vrot.lane.b32.xlu0 %v171, 126
    %v176 = vpop.permute.xlu0 %175
    %177 = vrot.lane.b32.xlu0 %v172, 126
    %v178 = vpop.permute.xlu0 %177
    %v181 = vadd.f32 %v167, %v176
    %v182 = vadd.f32 %v168, %v178
    %s183 = sld [smem:[#allocation7 + $0x3]]
    %v184 = vstv %s183
    %v185 = vmul.f32 %v184, %v149
    %v186 = vmul.f32 %v184, %v150
    %189 = vrot.lane.b32.xlu0 %v185, 125
    %v190 = vpop.permute.xlu0 %189
    %191 = vrot.lane.b32.xlu0 %v186, 125
    %v192 = vpop.permute.xlu0 %191
    %v195 = vadd.f32 %v181, %v190
    %v196 = vadd.f32 %v182, %v192
    %s197 = sld [smem:[#allocation7 + $0x4]]
    %v198 = vstv %s197
    %v199 = vmul.f32 %v198, %v149
    %v200 = vmul.f32 %v198, %v150
    %203 = vrot.lane.b32.xlu0 %v199, 124
    %v204 = vpop.permute.xlu0 %203
    %205 = vrot.lane.b32.xlu0 %v200, 124
    %v206 = vpop.permute.xlu0 %205
    %v209 = vadd.f32 %v195, %v204
    %v210 = vadd.f32 %v196, %v206
    %s211 = sld [smem:[#allocation7 + $0x5]]
    %v212 = vstv %s211
    %v213 = vmul.f32 %v212, %v149
    %v214 = vmul.f32 %v212, %v150
    %217 = vrot.lane.b32.xlu0 %v213, 123
    %v218 = vpop.permute.xlu0 %217
    %219 = vrot.lane.b32.xlu0 %v214, 123
    %v220 = vpop.permute.xlu0 %219
    %v223 = vadd.f32 %v209, %v218
    %v224 = vadd.f32 %v210, %v220
    %s225 = sld [smem:[#allocation7 + $0x6]]
    %v226 = vstv %s225
    %v227 = vmul.f32 %v226, %v149
    %v228 = vmul.f32 %v226, %v150
    %231 = vrot.lane.b32.xlu0 %v227, 122
    %v232 = vpop.permute.xlu0 %231
    %233 = vrot.lane.b32.xlu0 %v228, 122
    %v234 = vpop.permute.xlu0 %233
    %v237 = vadd.f32 %v223, %v232
    %v238 = vadd.f32 %v224, %v234
    %v239 = vld [vmem:[#allocation2 + $0x1] sm:$0xff]
    %v240 = vld [vmem:[#allocation2 + $0x9] sm:$0xff]
    %s241 = sld [smem:[#allocation7 + $0x7]]
    %v242 = vstv %s241
    %v243 = vmul.f32 %v242, %v239
    %v244 = vmul.f32 %v242, %v240
    %v245 = vadd.f32 %v237, %v243
    %v246 = vadd.f32 %v238, %v244
    %s247 = sld [smem:[#allocation7 + $0x8]]
    %v248 = vstv %s247
    %v249 = vmul.f32 %v248, %v239
    %v250 = vmul.f32 %v248, %v240
    %253 = vrot.lane.b32.xlu0 %v249, 127
    %v254 = vpop.permute.xlu0 %253
    %255 = vrot.lane.b32.xlu0 %v250, 127
    %v256 = vpop.permute.xlu0 %255
    %v259 = vadd.f32 %v245, %v254
    %v260 = vadd.f32 %v246, %v256
    %s261 = sld [smem:[#allocation7 + $0x9]]
    %v262 = vstv %s261
    %v263 = vmul.f32 %v262, %v239
    %v264 = vmul.f32 %v262, %v240
    %267 = vrot.lane.b32.xlu0 %v263, 126
    %v268 = vpop.permute.xlu0 %267
    %269 = vrot.lane.b32.xlu0 %v264, 126
    %v270 = vpop.permute.xlu0 %269
    %v273 = vadd.f32 %v259, %v268
    %v274 = vadd.f32 %v260, %v270
    %s275 = sld [smem:[#allocation7 + $0xa]]
    %v276 = vstv %s275
    %v277 = vmul.f32 %v276, %v239
    %v278 = vmul.f32 %v276, %v240
    %281 = vrot.lane.b32.xlu0 %v277, 125
    %v282 = vpop.permute.xlu0 %281
    %283 = vrot.lane.b32.xlu0 %v278, 125
    %v284 = vpop.permute.xlu0 %283
    %v287 = vadd.f32 %v273, %v282
    %v288 = vadd.f32 %v274, %v284
    %s289 = sld [smem:[#allocation7 + $0xb]]
    %v290 = vstv %s289
    %v291 = vmul.f32 %v290, %v239
    %v292 = vmul.f32 %v290, %v240
    %295 = vrot.lane.b32.xlu0 %v291, 124
    %v296 = vpop.permute.xlu0 %295
    %297 = vrot.lane.b32.xlu0 %v292, 124
    %v298 = vpop.permute.xlu0 %297
    %v301 = vadd.f32 %v287, %v296
    %v302 = vadd.f32 %v288, %v298
    %s303 = sld [smem:[#allocation7 + $0xc]]
    %v304 = vstv %s303
    %v305 = vmul.f32 %v304, %v239
    %v306 = vmul.f32 %v304, %v240
    %309 = vrot.lane.b32.xlu0 %v305, 123
    %v310 = vpop.permute.xlu0 %309
    %311 = vrot.lane.b32.xlu0 %v306, 123
    %v312 = vpop.permute.xlu0 %311
    %v315 = vadd.f32 %v301, %v310
    %v316 = vadd.f32 %v302, %v312
    %s317 = sld [smem:[#allocation7 + $0xd]]
    %v318 = vstv %s317
    %v319 = vmul.f32 %v318, %v239
    %v320 = vmul.f32 %v318, %v240
    %323 = vrot.lane.b32.xlu0 %v319, 122
    %v324 = vpop.permute.xlu0 %323
    %325 = vrot.lane.b32.xlu0 %v320, 122
    %v326 = vpop.permute.xlu0 %325
    %v329 = vadd.f32 %v315, %v324
    %v330 = vadd.f32 %v316, %v326
    %v331 = vld [vmem:[#allocation2 + $0x2] sm:$0xff]
    %v332 = vld [vmem:[#allocation2 + $0xa] sm:$0xff]
    %s333 = sld [smem:[#allocation7 + $0xe]]
    %v334 = vstv %s333
    %v335 = vmul.f32 %v334, %v331
    %v336 = vmul.f32 %v334, %v332
    %v337 = vadd.f32 %v329, %v335
    %v338 = vadd.f32 %v330, %v336
    %s339 = sld [smem:[#allocation7 + $0xf]]
    %v340 = vstv %s339
    %v341 = vmul.f32 %v340, %v331
    %v342 = vmul.f32 %v340, %v332
    %345 = vrot.lane.b32.xlu0 %v341, 127
    %v346 = vpop.permute.xlu0 %345
    %347 = vrot.lane.b32.xlu0 %v342, 127
    %v348 = vpop.permute.xlu0 %347
    %v351 = vadd.f32 %v337, %v346
    %v352 = vadd.f32 %v338, %v348
    %s353 = sld [smem:[#allocation7 + $0x10]]
    %v354 = vstv %s353
    %v355 = vmul.f32 %v354, %v331
    %v356 = vmul.f32 %v354, %v332
    %359 = vrot.lane.b32.xlu0 %v355, 126
    %v360 = vpop.permute.xlu0 %359
    %361 = vrot.lane.b32.xlu0 %v356, 126
    %v362 = vpop.permute.xlu0 %361
    %v365 = vadd.f32 %v351, %v360
    %v366 = vadd.f32 %v352, %v362
    %s367 = sld [smem:[#allocation7 + $0x11]]
    %v368 = vstv %s367
    %v369 = vmul.f32 %v368, %v331
    %v370 = vmul.f32 %v368, %v332
    %373 = vrot.lane.b32.xlu0 %v369, 125
    %v374 = vpop.permute.xlu0 %373
    %375 = vrot.lane.b32.xlu0 %v370, 125
    %v376 = vpop.permute.xlu0 %375
    %v379 = vadd.f32 %v365, %v374
    %v380 = vadd.f32 %v366, %v376
    %s381 = sld [smem:[#allocation7 + $0x12]]
    %v382 = vstv %s381
    %v383 = vmul.f32 %v382, %v331
    %v384 = vmul.f32 %v382, %v332
    %387 = vrot.lane.b32.xlu0 %v383, 124
    %v388 = vpop.permute.xlu0 %387
    %389 = vrot.lane.b32.xlu0 %v384, 124
    %v390 = vpop.permute.xlu0 %389
    %v393 = vadd.f32 %v379, %v388
    %v394 = vadd.f32 %v380, %v390
    %s395 = sld [smem:[#allocation7 + $0x13]]
    %v396 = vstv %s395
    %v397 = vmul.f32 %v396, %v331
    %v398 = vmul.f32 %v396, %v332
    %401 = vrot.lane.b32.xlu0 %v397, 123
    %v402 = vpop.permute.xlu0 %401
    %403 = vrot.lane.b32.xlu0 %v398, 123
    %v404 = vpop.permute.xlu0 %403
    %v407 = vadd.f32 %v393, %v402
    %v408 = vadd.f32 %v394, %v404
    %s409 = sld [smem:[#allocation7 + $0x14]]
    %v410 = vstv %s409
    %v411 = vmul.f32 %v410, %v331
    %v412 = vmul.f32 %v410, %v332
    %415 = vrot.lane.b32.xlu0 %v411, 122
    %v416 = vpop.permute.xlu0 %415
    %417 = vrot.lane.b32.xlu0 %v412, 122
    %v418 = vpop.permute.xlu0 %417
    %v421 = vadd.f32 %v407, %v416
    %v422 = vadd.f32 %v408, %v418
    %v423 = vld [vmem:[#allocation2 + $0x3] sm:$0xff]
    %v424 = vld [vmem:[#allocation2 + $0xb] sm:$0xff]
    %s425 = sld [smem:[#allocation7 + $0x15]]
    %v426 = vstv %s425
    %v427 = vmul.f32 %v426, %v423
    %v428 = vmul.f32 %v426, %v424
    %v429 = vadd.f32 %v421, %v427
    %v430 = vadd.f32 %v422, %v428
    %s431 = sld [smem:[#allocation7 + $0x16]]
    %v432 = vstv %s431
    %v433 = vmul.f32 %v432, %v423
    %v434 = vmul.f32 %v432, %v424
    %437 = vrot.lane.b32.xlu0 %v433, 127
    %v438 = vpop.permute.xlu0 %437
    %439 = vrot.lane.b32.xlu0 %v434, 127
    %v440 = vpop.permute.xlu0 %439
    %v443 = vadd.f32 %v429, %v438
    %v444 = vadd.f32 %v430, %v440
    %s445 = sld [smem:[#allocation7 + $0x17]]
    %v446 = vstv %s445
    %v447 = vmul.f32 %v446, %v423
    %v448 = vmul.f32 %v446, %v424
    %451 = vrot.lane.b32.xlu0 %v447, 126
    %v452 = vpop.permute.xlu0 %451
    %453 = vrot.lane.b32.xlu0 %v448, 126
    %v454 = vpop.permute.xlu0 %453
    %v457 = vadd.f32 %v443, %v452
    %v458 = vadd.f32 %v444, %v454
    %s459 = sld [smem:[#allocation7 + $0x18]]
    %v460 = vstv %s459
    %v461 = vmul.f32 %v460, %v423
    %v462 = vmul.f32 %v460, %v424
    %465 = vrot.lane.b32.xlu0 %v461, 125
    %v466 = vpop.permute.xlu0 %465
    %467 = vrot.lane.b32.xlu0 %v462, 125
    %v468 = vpop.permute.xlu0 %467
    %v471 = vadd.f32 %v457, %v466
    %v472 = vadd.f32 %v458, %v468
    %s473 = sld [smem:[#allocation7 + $0x19]]
    %v474 = vstv %s473
    %v475 = vmul.f32 %v474, %v423
    %v476 = vmul.f32 %v474, %v424
    %479 = vrot.lane.b32.xlu0 %v475, 124
    %v480 = vpop.permute.xlu0 %479
    %481 = vrot.lane.b32.xlu0 %v476, 124
    %v482 = vpop.permute.xlu0 %481
    %v485 = vadd.f32 %v471, %v480
    %v486 = vadd.f32 %v472, %v482
    %s487 = sld [smem:[#allocation7 + $0x1a]]
    %v488 = vstv %s487
    %v489 = vmul.f32 %v488, %v423
    %v490 = vmul.f32 %v488, %v424
    %493 = vrot.lane.b32.xlu0 %v489, 123
    %v494 = vpop.permute.xlu0 %493
    %495 = vrot.lane.b32.xlu0 %v490, 123
    %v496 = vpop.permute.xlu0 %495
    %v499 = vadd.f32 %v485, %v494
    %v500 = vadd.f32 %v486, %v496
    %s501 = sld [smem:[#allocation7 + $0x1b]]
    %v502 = vstv %s501
    %v503 = vmul.f32 %v502, %v423
    %v504 = vmul.f32 %v502, %v424
    %507 = vrot.lane.b32.xlu0 %v503, 122
    %v508 = vpop.permute.xlu0 %507
    %509 = vrot.lane.b32.xlu0 %v504, 122
    %v510 = vpop.permute.xlu0 %509
    %v513 = vadd.f32 %v499, %v508
    %v514 = vadd.f32 %v500, %v510
    %v515 = vld [vmem:[#allocation2 + $0x4] sm:$0xff]
    %v516 = vld [vmem:[#allocation2 + $0xc] sm:$0xff]
    %s517 = sld [smem:[#allocation7 + $0x1c]]
    %v518 = vstv %s517
    %v519 = vmul.f32 %v518, %v515
    %v520 = vmul.f32 %v518, %v516
    %v521 = vadd.f32 %v513, %v519
    %v522 = vadd.f32 %v514, %v520
    %s523 = sld [smem:[#allocation7 + $0x1d]]
    %v524 = vstv %s523
    %v525 = vmul.f32 %v524, %v515
    %v526 = vmul.f32 %v524, %v516
    %529 = vrot.lane.b32.xlu0 %v525, 127
    %v530 = vpop.permute.xlu0 %529
    %531 = vrot.lane.b32.xlu0 %v526, 127
    %v532 = vpop.permute.xlu0 %531
    %v535 = vadd.f32 %v521, %v530
    %v536 = vadd.f32 %v522, %v532
    %s537 = sld [smem:[#allocation7 + $0x1e]]
    %v538 = vstv %s537
    %v539 = vmul.f32 %v538, %v515
    %v540 = vmul.f32 %v538, %v516
    %543 = vrot.lane.b32.xlu0 %v539, 126
    %v544 = vpop.permute.xlu0 %543
    %545 = vrot.lane.b32.xlu0 %v540, 126
    %v546 = vpop.permute.xlu0 %545
    %v549 = vadd.f32 %v535, %v544
    %v550 = vadd.f32 %v536, %v546
    %s551 = sld [smem:[#allocation7 + $0x1f]]
    %v552 = vstv %s551
    %v553 = vmul.f32 %v552, %v515
    %v554 = vmul.f32 %v552, %v516
    %557 = vrot.lane.b32.xlu0 %v553, 125
    %v558 = vpop.permute.xlu0 %557
    %559 = vrot.lane.b32.xlu0 %v554, 125
    %v560 = vpop.permute.xlu0 %559
    %v563 = vadd.f32 %v549, %v558
    %v564 = vadd.f32 %v550, %v560
    %s565 = sld [smem:[#allocation7 + $0x20]]
    %v566 = vstv %s565
    %v567 = vmul.f32 %v566, %v515
    %v568 = vmul.f32 %v566, %v516
    %571 = vrot.lane.b32.xlu0 %v567, 124
    %v572 = vpop.permute.xlu0 %571
    %573 = vrot.lane.b32.xlu0 %v568, 124
    %v574 = vpop.permute.xlu0 %573
    %v577 = vadd.f32 %v563, %v572
    %v578 = vadd.f32 %v564, %v574
    %s579 = sld [smem:[#allocation7 + $0x21]]
    %v580 = vstv %s579
    %v581 = vmul.f32 %v580, %v515
    %v582 = vmul.f32 %v580, %v516
    %585 = vrot.lane.b32.xlu0 %v581, 123
    %v586 = vpop.permute.xlu0 %585
    %587 = vrot.lane.b32.xlu0 %v582, 123
    %v588 = vpop.permute.xlu0 %587
    %v591 = vadd.f32 %v577, %v586
    %v592 = vadd.f32 %v578, %v588
    %s593 = sld [smem:[#allocation7 + $0x22]]
    %v594 = vstv %s593
    %v595 = vmul.f32 %v594, %v515
    %v596 = vmul.f32 %v594, %v516
    %599 = vrot.lane.b32.xlu0 %v595, 122
    %v600 = vpop.permute.xlu0 %599
    %601 = vrot.lane.b32.xlu0 %v596, 122
    %v602 = vpop.permute.xlu0 %601
    %v605 = vadd.f32 %v591, %v600
    %v606 = vadd.f32 %v592, %v602
    %v607 = vld [vmem:[#allocation2 + $0x5] sm:$0xff]
    %v608 = vld [vmem:[#allocation2 + $0xd] sm:$0xff]
    %s609 = sld [smem:[#allocation7 + $0x23]]
    %v610 = vstv %s609
    %v611 = vmul.f32 %v610, %v607
    %v612 = vmul.f32 %v610, %v608
    %v613 = vadd.f32 %v605, %v611
    %v614 = vadd.f32 %v606, %v612
    %s615 = sld [smem:[#allocation7 + $0x24]]
    %v616 = vstv %s615
    %v617 = vmul.f32 %v616, %v607
    %v618 = vmul.f32 %v616, %v608
    %621 = vrot.lane.b32.xlu0 %v617, 127
    %v622 = vpop.permute.xlu0 %621
    %623 = vrot.lane.b32.xlu0 %v618, 127
    %v624 = vpop.permute.xlu0 %623
    %v627 = vadd.f32 %v613, %v622
    %v628 = vadd.f32 %v614, %v624
    %s629 = sld [smem:[#allocation7 + $0x25]]
    %v630 = vstv %s629
    %v631 = vmul.f32 %v630, %v607
    %v632 = vmul.f32 %v630, %v608
    %635 = vrot.lane.b32.xlu0 %v631, 126
    %v636 = vpop.permute.xlu0 %635
    %637 = vrot.lane.b32.xlu0 %v632, 126
    %v638 = vpop.permute.xlu0 %637
    %v641 = vadd.f32 %v627, %v636
    %v642 = vadd.f32 %v628, %v638
    %s643 = sld [smem:[#allocation7 + $0x26]]
    %v644 = vstv %s643
    %v645 = vmul.f32 %v644, %v607
    %v646 = vmul.f32 %v644, %v608
    %649 = vrot.lane.b32.xlu0 %v645, 125
    %v650 = vpop.permute.xlu0 %649
    %651 = vrot.lane.b32.xlu0 %v646, 125
    %v652 = vpop.permute.xlu0 %651
    %v655 = vadd.f32 %v641, %v650
    %v656 = vadd.f32 %v642, %v652
    %s657 = sld [smem:[#allocation7 + $0x27]]
    %v658 = vstv %s657
    %v659 = vmul.f32 %v658, %v607
    %v660 = vmul.f32 %v658, %v608
    %663 = vrot.lane.b32.xlu0 %v659, 124
    %v664 = vpop.permute.xlu0 %663
    %665 = vrot.lane.b32.xlu0 %v660, 124
    %v666 = vpop.permute.xlu0 %665
    %v669 = vadd.f32 %v655, %v664
    %v670 = vadd.f32 %v656, %v666
    %s671 = sld [smem:[#allocation7 + $0x28]]
    %v672 = vstv %s671
    %v673 = vmul.f32 %v672, %v607
    %v674 = vmul.f32 %v672, %v608
    %677 = vrot.lane.b32.xlu0 %v673, 123
    %v678 = vpop.permute.xlu0 %677
    %679 = vrot.lane.b32.xlu0 %v674, 123
    %v680 = vpop.permute.xlu0 %679
    %v683 = vadd.f32 %v669, %v678
    %v684 = vadd.f32 %v670, %v680
    %s685 = sld [smem:[#allocation7 + $0x29]]
    %v686 = vstv %s685
    %v687 = vmul.f32 %v686, %v607
    %v688 = vmul.f32 %v686, %v608
    %691 = vrot.lane.b32.xlu0 %v687, 122
    %v692 = vpop.permute.xlu0 %691
    %693 = vrot.lane.b32.xlu0 %v688, 122
    %v694 = vpop.permute.xlu0 %693
    %v697 = vadd.f32 %v683, %v692
    %v698 = vadd.f32 %v684, %v694
    %v699 = vld [vmem:[#allocation2 + $0x6] sm:$0xff]
    %v700 = vld [vmem:[#allocation2 + $0xe] sm:$0xff]
    %s701 = sld [smem:[#allocation7 + $0x2a]]
    %v702 = vstv %s701
    %v703 = vmul.f32 %v702, %v699
    %v704 = vmul.f32 %v702, %v700
    %v705 = vadd.f32 %v697, %v703
    %v706 = vadd.f32 %v698, %v704
    %s707 = sld [smem:[#allocation7 + $0x2b]]
    %v708 = vstv %s707
    %v709 = vmul.f32 %v708, %v699
    %v710 = vmul.f32 %v708, %v700
    %713 = vrot.lane.b32.xlu0 %v709, 127
    %v714 = vpop.permute.xlu0 %713
    %715 = vrot.lane.b32.xlu0 %v710, 127
    %v716 = vpop.permute.xlu0 %715
    %v719 = vadd.f32 %v705, %v714
    %v720 = vadd.f32 %v706, %v716
    %s721 = sld [smem:[#allocation7 + $0x2c]]
    %v722 = vstv %s721
    %v723 = vmul.f32 %v722, %v699
    %v724 = vmul.f32 %v722, %v700
    %727 = vrot.lane.b32.xlu0 %v723, 126
    %v728 = vpop.permute.xlu0 %727
    %729 = vrot.lane.b32.xlu0 %v724, 126
    %v730 = vpop.permute.xlu0 %729
    %v733 = vadd.f32 %v719, %v728
    %v734 = vadd.f32 %v720, %v730
    %s735 = sld [smem:[#allocation7 + $0x2d]]
    %v736 = vstv %s735
    %v737 = vmul.f32 %v736, %v699
    %v738 = vmul.f32 %v736, %v700
    %741 = vrot.lane.b32.xlu0 %v737, 125
    %v742 = vpop.permute.xlu0 %741
    %743 = vrot.lane.b32.xlu0 %v738, 125
    %v744 = vpop.permute.xlu0 %743
    %v747 = vadd.f32 %v733, %v742
    %v748 = vadd.f32 %v734, %v744
    %s749 = sld [smem:[#allocation7 + $0x2e]]
    %v750 = vstv %s749
    %v751 = vmul.f32 %v750, %v699
    %v752 = vmul.f32 %v750, %v700
    %755 = vrot.lane.b32.xlu0 %v751, 124
    %v756 = vpop.permute.xlu0 %755
    %757 = vrot.lane.b32.xlu0 %v752, 124
    %v758 = vpop.permute.xlu0 %757
    %v761 = vadd.f32 %v747, %v756
    %v762 = vadd.f32 %v748, %v758
    %s763 = sld [smem:[#allocation7 + $0x2f]]
    %v764 = vstv %s763
    %v765 = vmul.f32 %v764, %v699
    %v766 = vmul.f32 %v764, %v700
    %769 = vrot.lane.b32.xlu0 %v765, 123
    %v770 = vpop.permute.xlu0 %769
    %771 = vrot.lane.b32.xlu0 %v766, 123
    %v772 = vpop.permute.xlu0 %771
    %v775 = vadd.f32 %v761, %v770
    %v776 = vadd.f32 %v762, %v772
    %s777 = sld [smem:[#allocation7 + $0x30]]
    %v778 = vstv %s777
    %v779 = vmul.f32 %v778, %v699
    %v780 = vmul.f32 %v778, %v700
    %783 = vrot.lane.b32.xlu0 %v779, 122
    %v784 = vpop.permute.xlu0 %783
    %785 = vrot.lane.b32.xlu0 %v780, 122
    %v786 = vpop.permute.xlu0 %785
    %v789 = vadd.f32 %v775, %v784
    %v790 = vadd.f32 %v776, %v786
    %v791 = vld [vmem:[%s80] sm:$0xff]
    %v792 = vld [vmem:[%s80 + $0x8] sm:$0xff]
    %s793 = sld [smem:[#allocation7 + $0x31]]
    %v794 = vstv %s793
    %v795 = vmul.f32 %v794, %v791
    %v796 = vmul.f32 %v794, %v792
    %v797 = vadd.f32 %v789, %v795
    %v798 = vadd.f32 %v790, %v796
    %s799 = sld [smem:[#allocation7 + $0x32]]
    %v800 = vstv %s799
    %v801 = vmul.f32 %v800, %v791
    %v802 = vmul.f32 %v800, %v792
    %805 = vrot.lane.b32.xlu0 %v801, 127
    %v806 = vpop.permute.xlu0 %805
    %807 = vrot.lane.b32.xlu0 %v802, 127
    %v808 = vpop.permute.xlu0 %807
    %v811 = vadd.f32 %v797, %v806
    %v812 = vadd.f32 %v798, %v808
    %s813 = sld [smem:[#allocation7 + $0x33]]
    %v814 = vstv %s813
    %v815 = vmul.f32 %v814, %v791
    %v816 = vmul.f32 %v814, %v792
    %819 = vrot.lane.b32.xlu0 %v815, 126
    %v820 = vpop.permute.xlu0 %819
    %821 = vrot.lane.b32.xlu0 %v816, 126
    %v822 = vpop.permute.xlu0 %821
    %v825 = vadd.f32 %v811, %v820
    %v826 = vadd.f32 %v812, %v822
    %s827 = sld [smem:[#allocation7 + $0x34]]
    %v828 = vstv %s827
    %v829 = vmul.f32 %v828, %v791
    %v830 = vmul.f32 %v828, %v792
    %833 = vrot.lane.b32.xlu0 %v829, 125
    %v834 = vpop.permute.xlu0 %833
    %835 = vrot.lane.b32.xlu0 %v830, 125
    %v836 = vpop.permute.xlu0 %835
    %v839 = vadd.f32 %v825, %v834
    %v840 = vadd.f32 %v826, %v836
    %s841 = sld [smem:[#allocation7 + $0x35]]
    %v842 = vstv %s841
    %v843 = vmul.f32 %v842, %v791
    %v844 = vmul.f32 %v842, %v792
    %847 = vrot.lane.b32.xlu0 %v843, 124
    %v848 = vpop.permute.xlu0 %847
    %849 = vrot.lane.b32.xlu0 %v844, 124
    %v850 = vpop.permute.xlu0 %849
    %v853 = vadd.f32 %v839, %v848
    %v854 = vadd.f32 %v840, %v850
    %s855 = sld [smem:[#allocation7 + $0x36]]
    %v856 = vstv %s855
    %v857 = vmul.f32 %v856, %v791
    %v858 = vmul.f32 %v856, %v792
    %861 = vrot.lane.b32.xlu0 %v857, 123
    %v862 = vpop.permute.xlu0 %861
    %863 = vrot.lane.b32.xlu0 %v858, 123
    %v864 = vpop.permute.xlu0 %863
    %v867 = vadd.f32 %v853, %v862
    %v868 = vadd.f32 %v854, %v864
    %s869 = sld [smem:[#allocation7 + $0x37]]
    %v870 = vstv %s869
    %v871 = vmul.f32 %v870, %v791
    %v872 = vmul.f32 %v870, %v792
    %875 = vrot.lane.b32.xlu0 %v871, 122
    %v876 = vpop.permute.xlu0 %875
    %877 = vrot.lane.b32.xlu0 %v872, 122
    %v878 = vpop.permute.xlu0 %877
    %v881 = vadd.f32 %v867, %v876
    %v882 = vadd.f32 %v868, %v878
    %v883 = vld [vmem:[%s80 + $0x1] sm:$0xff]
    %v884 = vld [vmem:[%s80 + $0x9] sm:$0xff]
    %s885 = sld [smem:[#allocation7 + $0x38]]
    %v886 = vstv %s885
    %v887 = vmul.f32 %v886, %v883
    %v888 = vmul.f32 %v886, %v884
    %v889 = vadd.f32 %v881, %v887
    %v890 = vadd.f32 %v882, %v888
    %s891 = sld [smem:[#allocation7 + $0x39]]
    %v892 = vstv %s891
    %v893 = vmul.f32 %v892, %v883
    %v894 = vmul.f32 %v892, %v884
    %897 = vrot.lane.b32.xlu0 %v893, 127
    %v898 = vpop.permute.xlu0 %897
    %899 = vrot.lane.b32.xlu0 %v894, 127
    %v900 = vpop.permute.xlu0 %899
    %v903 = vadd.f32 %v889, %v898
    %v904 = vadd.f32 %v890, %v900
    %s905 = sld [smem:[#allocation7 + $0x3a]]
    %v906 = vstv %s905
    %v907 = vmul.f32 %v906, %v883
    %v908 = vmul.f32 %v906, %v884
    %911 = vrot.lane.b32.xlu0 %v907, 126
    %v912 = vpop.permute.xlu0 %911
    %913 = vrot.lane.b32.xlu0 %v908, 126
    %v914 = vpop.permute.xlu0 %913
    %v917 = vadd.f32 %v903, %v912
    %v918 = vadd.f32 %v904, %v914
    %s919 = sld [smem:[#allocation7 + $0x3b]]
    %v920 = vstv %s919
    %v921 = vmul.f32 %v920, %v883
    %v922 = vmul.f32 %v920, %v884
    %925 = vrot.lane.b32.xlu0 %v921, 125
    %v926 = vpop.permute.xlu0 %925
    %927 = vrot.lane.b32.xlu0 %v922, 125
    %v928 = vpop.permute.xlu0 %927
    %v931 = vadd.f32 %v917, %v926
    %v932 = vadd.f32 %v918, %v928
    %s933 = sld [smem:[#allocation7 + $0x3c]]
    %v934 = vstv %s933
    %v935 = vmul.f32 %v934, %v883
    %v936 = vmul.f32 %v934, %v884
    %939 = vrot.lane.b32.xlu0 %v935, 124
    %v940 = vpop.permute.xlu0 %939
    %941 = vrot.lane.b32.xlu0 %v936, 124
    %v942 = vpop.permute.xlu0 %941
    %v945 = vadd.f32 %v931, %v940
    %v946 = vadd.f32 %v932, %v942
    %s947 = sld [smem:[#allocation7 + $0x3d]]
    %v948 = vstv %s947
    %v949 = vmul.f32 %v948, %v883
    %v950 = vmul.f32 %v948, %v884
    %953 = vrot.lane.b32.xlu0 %v949, 123
    %v954 = vpop.permute.xlu0 %953
    %955 = vrot.lane.b32.xlu0 %v950, 123
    %v956 = vpop.permute.xlu0 %955
    %v959 = vadd.f32 %v945, %v954
    %v960 = vadd.f32 %v946, %v956
    %s961 = sld [smem:[#allocation7 + $0x3e]]
    %v962 = vstv %s961
    %v963 = vmul.f32 %v962, %v883
    %v964 = vmul.f32 %v962, %v884
    %967 = vrot.lane.b32.xlu0 %v963, 122
    %v968 = vpop.permute.xlu0 %967
    %969 = vrot.lane.b32.xlu0 %v964, 122
    %v970 = vpop.permute.xlu0 %969
    %v973 = vadd.f32 %v959, %v968
    %v974 = vadd.f32 %v960, %v970
    %v975 = vld [vmem:[%s80 + $0x2] sm:$0xff]
    %v976 = vld [vmem:[%s80 + $0xa] sm:$0xff]
    %s977 = sld [smem:[#allocation7 + $0x3f]]
    %v978 = vstv %s977
    %v979 = vmul.f32 %v978, %v975
    %v980 = vmul.f32 %v978, %v976
    %v981 = vadd.f32 %v973, %v979
    %v982 = vadd.f32 %v974, %v980
    %s983 = sld [smem:[#allocation7 + $0x40]]
    %v984 = vstv %s983
    %v985 = vmul.f32 %v984, %v975
    %v986 = vmul.f32 %v984, %v976
    %989 = vrot.lane.b32.xlu0 %v985, 127
    %v990 = vpop.permute.xlu0 %989
    %991 = vrot.lane.b32.xlu0 %v986, 127
    %v992 = vpop.permute.xlu0 %991
    %v995 = vadd.f32 %v981, %v990
    %v996 = vadd.f32 %v982, %v992
    %s997 = sld [smem:[#allocation7 + $0x41]]
    %v998 = vstv %s997
    %v999 = vmul.f32 %v998, %v975
    %v1000 = vmul.f32 %v998, %v976
    %1003 = vrot.lane.b32.xlu0 %v999, 126
    %v1004 = vpop.permute.xlu0 %1003
    %1005 = vrot.lane.b32.xlu0 %v1000, 126
    %v1006 = vpop.permute.xlu0 %1005
    %v1009 = vadd.f32 %v995, %v1004
    %v1010 = vadd.f32 %v996, %v1006
    %s1011 = sld [smem:[#allocation7 + $0x42]]
    %v1012 = vstv %s1011
    %v1013 = vmul.f32 %v1012, %v975
    %v1014 = vmul.f32 %v1012, %v976
    %1017 = vrot.lane.b32.xlu0 %v1013, 125
    %v1018 = vpop.permute.xlu0 %1017
    %1019 = vrot.lane.b32.xlu0 %v1014, 125
    %v1020 = vpop.permute.xlu0 %1019
    %v1023 = vadd.f32 %v1009, %v1018
    %v1024 = vadd.f32 %v1010, %v1020
    %s1025 = sld [smem:[#allocation7 + $0x43]]
    %v1026 = vstv %s1025
    %v1027 = vmul.f32 %v1026, %v975
    %v1028 = vmul.f32 %v1026, %v976
    %1031 = vrot.lane.b32.xlu0 %v1027, 124
    %v1032 = vpop.permute.xlu0 %1031
    %1033 = vrot.lane.b32.xlu0 %v1028, 124
    %v1034 = vpop.permute.xlu0 %1033
    %v1037 = vadd.f32 %v1023, %v1032
    %v1038 = vadd.f32 %v1024, %v1034
    %s1039 = sld [smem:[#allocation7 + $0x44]]
    %v1040 = vstv %s1039
    %v1041 = vmul.f32 %v1040, %v975
    %v1042 = vmul.f32 %v1040, %v976
    %1045 = vrot.lane.b32.xlu0 %v1041, 123
    %v1046 = vpop.permute.xlu0 %1045
    %1047 = vrot.lane.b32.xlu0 %v1042, 123
    %v1048 = vpop.permute.xlu0 %1047
    %v1051 = vadd.f32 %v1037, %v1046
    %v1052 = vadd.f32 %v1038, %v1048
    %s1053 = sld [smem:[#allocation7 + $0x45]]
    %v1054 = vstv %s1053
    %v1055 = vmul.f32 %v1054, %v975
    %v1056 = vmul.f32 %v1054, %v976
    %1059 = vrot.lane.b32.xlu0 %v1055, 122
    %v1060 = vpop.permute.xlu0 %1059
    %1061 = vrot.lane.b32.xlu0 %v1056, 122
    %v1062 = vpop.permute.xlu0 %1061
    %v1065 = vadd.f32 %v1051, %v1060
    %v1066 = vadd.f32 %v1052, %v1062
    %v1067 = vld [vmem:[%s80 + $0x3] sm:$0xff]
    %v1068 = vld [vmem:[%s80 + $0xb] sm:$0xff]
    %s1069 = sld [smem:[#allocation7 + $0x46]]
    %v1070 = vstv %s1069
    %v1071 = vmul.f32 %v1070, %v1067
    %v1072 = vmul.f32 %v1070, %v1068
    %v1073 = vadd.f32 %v1065, %v1071
    %v1074 = vadd.f32 %v1066, %v1072
    %s1075 = sld [smem:[#allocation7 + $0x47]]
    %v1076 = vstv %s1075
    %v1077 = vmul.f32 %v1076, %v1067
    %v1078 = vmul.f32 %v1076, %v1068
    %1081 = vrot.lane.b32.xlu0 %v1077, 127
    %v1082 = vpop.permute.xlu0 %1081
    %1083 = vrot.lane.b32.xlu0 %v1078, 127
    %v1084 = vpop.permute.xlu0 %1083
    %v1087 = vadd.f32 %v1073, %v1082
    %v1088 = vadd.f32 %v1074, %v1084
    %s1089 = sld [smem:[#allocation7 + $0x48]]
    %v1090 = vstv %s1089
    %v1091 = vmul.f32 %v1090, %v1067
    %v1092 = vmul.f32 %v1090, %v1068
    %1095 = vrot.lane.b32.xlu0 %v1091, 126
    %v1096 = vpop.permute.xlu0 %1095
    %1097 = vrot.lane.b32.xlu0 %v1092, 126
    %v1098 = vpop.permute.xlu0 %1097
    %v1101 = vadd.f32 %v1087, %v1096
    %v1102 = vadd.f32 %v1088, %v1098
    %s1103 = sld [smem:[#allocation7 + $0x49]]
    %v1104 = vstv %s1103
    %v1105 = vmul.f32 %v1104, %v1067
    %v1106 = vmul.f32 %v1104, %v1068
    %1109 = vrot.lane.b32.xlu0 %v1105, 125
    %v1110 = vpop.permute.xlu0 %1109
    %1111 = vrot.lane.b32.xlu0 %v1106, 125
    %v1112 = vpop.permute.xlu0 %1111
    %v1115 = vadd.f32 %v1101, %v1110
    %v1116 = vadd.f32 %v1102, %v1112
    %s1117 = sld [smem:[#allocation7 + $0x4a]]
    %v1118 = vstv %s1117
    %v1119 = vmul.f32 %v1118, %v1067
    %v1120 = vmul.f32 %v1118, %v1068
    %1123 = vrot.lane.b32.xlu0 %v1119, 124
    %v1124 = vpop.permute.xlu0 %1123
    %1125 = vrot.lane.b32.xlu0 %v1120, 124
    %v1126 = vpop.permute.xlu0 %1125
    %v1129 = vadd.f32 %v1115, %v1124
    %v1130 = vadd.f32 %v1116, %v1126
    %s1131 = sld [smem:[#allocation7 + $0x4b]]
    %v1132 = vstv %s1131
    %v1133 = vmul.f32 %v1132, %v1067
    %v1134 = vmul.f32 %v1132, %v1068
    %1137 = vrot.lane.b32.xlu0 %v1133, 123
    %v1138 = vpop.permute.xlu0 %1137
    %1139 = vrot.lane.b32.xlu0 %v1134, 123
    %v1140 = vpop.permute.xlu0 %1139
    %v1143 = vadd.f32 %v1129, %v1138
    %v1144 = vadd.f32 %v1130, %v1140
    %s1145 = sld [smem:[#allocation7 + $0x4c]]
    %v1146 = vstv %s1145
    %v1147 = vmul.f32 %v1146, %v1067
    %v1148 = vmul.f32 %v1146, %v1068
    %1151 = vrot.lane.b32.xlu0 %v1147, 122
    %v1152 = vpop.permute.xlu0 %1151
    %1153 = vrot.lane.b32.xlu0 %v1148, 122
    %v1154 = vpop.permute.xlu0 %1153
    %v1157 = vadd.f32 %v1143, %v1152
    %v1158 = vadd.f32 %v1144, %v1154
    %v1159 = vld [vmem:[%s80 + $0x4] sm:$0xff]
    %v1160 = vld [vmem:[%s80 + $0xc] sm:$0xff]
    %s1161 = sld [smem:[#allocation7 + $0x4d]]
    %v1162 = vstv %s1161
    %v1163 = vmul.f32 %v1162, %v1159
    %v1164 = vmul.f32 %v1162, %v1160
    %v1165 = vadd.f32 %v1157, %v1163
    %v1166 = vadd.f32 %v1158, %v1164
    %s1167 = sld [smem:[#allocation7 + $0x4e]]
    %v1168 = vstv %s1167
    %v1169 = vmul.f32 %v1168, %v1159
    %v1170 = vmul.f32 %v1168, %v1160
    %1173 = vrot.lane.b32.xlu0 %v1169, 127
    %v1174 = vpop.permute.xlu0 %1173
    %1175 = vrot.lane.b32.xlu0 %v1170, 127
    %v1176 = vpop.permute.xlu0 %1175
    %v1179 = vadd.f32 %v1165, %v1174
    %v1180 = vadd.f32 %v1166, %v1176
    %s1181 = sld [smem:[#allocation7 + $0x4f]]
    %v1182 = vstv %s1181
    %v1183 = vmul.f32 %v1182, %v1159
    %v1184 = vmul.f32 %v1182, %v1160
    %1187 = vrot.lane.b32.xlu0 %v1183, 126
    %v1188 = vpop.permute.xlu0 %1187
    %1189 = vrot.lane.b32.xlu0 %v1184, 126
    %v1190 = vpop.permute.xlu0 %1189
    %v1193 = vadd.f32 %v1179, %v1188
    %v1194 = vadd.f32 %v1180, %v1190
    %s1195 = sld [smem:[#allocation7 + $0x50]]
    %v1196 = vstv %s1195
    %v1197 = vmul.f32 %v1196, %v1159
    %v1198 = vmul.f32 %v1196, %v1160
    %1201 = vrot.lane.b32.xlu0 %v1197, 125
    %v1202 = vpop.permute.xlu0 %1201
    %1203 = vrot.lane.b32.xlu0 %v1198, 125
    %v1204 = vpop.permute.xlu0 %1203
    %v1207 = vadd.f32 %v1193, %v1202
    %v1208 = vadd.f32 %v1194, %v1204
    %s1209 = sld [smem:[#allocation7 + $0x51]]
    %v1210 = vstv %s1209
    %v1211 = vmul.f32 %v1210, %v1159
    %v1212 = vmul.f32 %v1210, %v1160
    %1215 = vrot.lane.b32.xlu0 %v1211, 124
    %v1216 = vpop.permute.xlu0 %1215
    %1217 = vrot.lane.b32.xlu0 %v1212, 124
    %v1218 = vpop.permute.xlu0 %1217
    %v1221 = vadd.f32 %v1207, %v1216
    %v1222 = vadd.f32 %v1208, %v1218
    %s1223 = sld [smem:[#allocation7 + $0x52]]
    %v1224 = vstv %s1223
    %v1225 = vmul.f32 %v1224, %v1159
    %v1226 = vmul.f32 %v1224, %v1160
    %1229 = vrot.lane.b32.xlu0 %v1225, 123
    %v1230 = vpop.permute.xlu0 %1229
    %1231 = vrot.lane.b32.xlu0 %v1226, 123
    %v1232 = vpop.permute.xlu0 %1231
    %v1235 = vadd.f32 %v1221, %v1230
    %v1236 = vadd.f32 %v1222, %v1232
    %s1237 = sld [smem:[#allocation7 + $0x53]]
    %v1238 = vstv %s1237
    %v1239 = vmul.f32 %v1238, %v1159
    %v1240 = vmul.f32 %v1238, %v1160
    %1243 = vrot.lane.b32.xlu0 %v1239, 122
    %v1244 = vpop.permute.xlu0 %1243
    %1245 = vrot.lane.b32.xlu0 %v1240, 122
    %v1246 = vpop.permute.xlu0 %1245
    %v1249 = vadd.f32 %v1235, %v1244
    %v1250 = vadd.f32 %v1236, %v1246
    %v1251 = vld [vmem:[%s80 + $0x5] sm:$0xff]
    %v1252 = vld [vmem:[%s80 + $0xd] sm:$0xff]
    %s1253 = sld [smem:[#allocation7 + $0x54]]
    %v1254 = vstv %s1253
    %v1255 = vmul.f32 %v1254, %v1251
    %v1256 = vmul.f32 %v1254, %v1252
    %v1257 = vadd.f32 %v1249, %v1255
    %v1258 = vadd.f32 %v1250, %v1256
    %s1259 = sld [smem:[#allocation7 + $0x55]]
    %v1260 = vstv %s1259
    %v1261 = vmul.f32 %v1260, %v1251
    %v1262 = vmul.f32 %v1260, %v1252
    %1265 = vrot.lane.b32.xlu0 %v1261, 127
    %v1266 = vpop.permute.xlu0 %1265
    %1267 = vrot.lane.b32.xlu0 %v1262, 127
    %v1268 = vpop.permute.xlu0 %1267
    %v1271 = vadd.f32 %v1257, %v1266
    %v1272 = vadd.f32 %v1258, %v1268
    %s1273 = sld [smem:[#allocation7 + $0x56]]
    %v1274 = vstv %s1273
    %v1275 = vmul.f32 %v1274, %v1251
    %v1276 = vmul.f32 %v1274, %v1252
    %1279 = vrot.lane.b32.xlu0 %v1275, 126
    %v1280 = vpop.permute.xlu0 %1279
    %1281 = vrot.lane.b32.xlu0 %v1276, 126
    %v1282 = vpop.permute.xlu0 %1281
    %v1285 = vadd.f32 %v1271, %v1280
    %v1286 = vadd.f32 %v1272, %v1282
    %s1287 = sld [smem:[#allocation7 + $0x57]]
    %v1288 = vstv %s1287
    %v1289 = vmul.f32 %v1288, %v1251
    %v1290 = vmul.f32 %v1288, %v1252
    %1293 = vrot.lane.b32.xlu0 %v1289, 125
    %v1294 = vpop.permute.xlu0 %1293
    %1295 = vrot.lane.b32.xlu0 %v1290, 125
    %v1296 = vpop.permute.xlu0 %1295
    %v1299 = vadd.f32 %v1285, %v1294
    %v1300 = vadd.f32 %v1286, %v1296
    %s1301 = sld [smem:[#allocation7 + $0x58]]
    %v1302 = vstv %s1301
    %v1303 = vmul.f32 %v1302, %v1251
    %v1304 = vmul.f32 %v1302, %v1252
    %1307 = vrot.lane.b32.xlu0 %v1303, 124
    %v1308 = vpop.permute.xlu0 %1307
    %1309 = vrot.lane.b32.xlu0 %v1304, 124
    %v1310 = vpop.permute.xlu0 %1309
    %v1313 = vadd.f32 %v1299, %v1308
    %v1314 = vadd.f32 %v1300, %v1310
    %s1315 = sld [smem:[#allocation7 + $0x59]]
    %v1316 = vstv %s1315
    %v1317 = vmul.f32 %v1316, %v1251
    %v1318 = vmul.f32 %v1316, %v1252
    %1321 = vrot.lane.b32.xlu0 %v1317, 123
    %v1322 = vpop.permute.xlu0 %1321
    %1323 = vrot.lane.b32.xlu0 %v1318, 123
    %v1324 = vpop.permute.xlu0 %1323
    %v1327 = vadd.f32 %v1313, %v1322
    %v1328 = vadd.f32 %v1314, %v1324
    %s1329 = sld [smem:[#allocation7 + $0x5a]]
    %v1330 = vstv %s1329
    %v1331 = vmul.f32 %v1330, %v1251
    %v1332 = vmul.f32 %v1330, %v1252
    %1335 = vrot.lane.b32.xlu0 %v1331, 122
    %v1336 = vpop.permute.xlu0 %1335
    %1337 = vrot.lane.b32.xlu0 %v1332, 122
    %v1338 = vpop.permute.xlu0 %1337
    %v1341 = vadd.f32 %v1327, %v1336
    %v1342 = vadd.f32 %v1328, %v1338
    %v1343 = vld [vmem:[%s80 + $0x6] sm:$0xff]
    %v1344 = vld [vmem:[%s80 + $0xe] sm:$0xff]
    %s1345 = sld [smem:[#allocation7 + $0x5b]]
    %v1346 = vstv %s1345
    %v1347 = vmul.f32 %v1346, %v1343
    %v1348 = vmul.f32 %v1346, %v1344
    %v1349 = vadd.f32 %v1341, %v1347
    %v1350 = vadd.f32 %v1342, %v1348
    %s1351 = sld [smem:[#allocation7 + $0x5c]]
    %v1352 = vstv %s1351
    %v1353 = vmul.f32 %v1352, %v1343
    %v1354 = vmul.f32 %v1352, %v1344
    %1357 = vrot.lane.b32.xlu0 %v1353, 127
    %v1358 = vpop.permute.xlu0 %1357
    %1359 = vrot.lane.b32.xlu0 %v1354, 127
    %v1360 = vpop.permute.xlu0 %1359
    %v1363 = vadd.f32 %v1349, %v1358
    %v1364 = vadd.f32 %v1350, %v1360
    %s1365 = sld [smem:[#allocation7 + $0x5d]]
    %v1366 = vstv %s1365
    %v1367 = vmul.f32 %v1366, %v1343
    %v1368 = vmul.f32 %v1366, %v1344
    %1371 = vrot.lane.b32.xlu0 %v1367, 126
    %v1372 = vpop.permute.xlu0 %1371
    %1373 = vrot.lane.b32.xlu0 %v1368, 126
    %v1374 = vpop.permute.xlu0 %1373
    %v1377 = vadd.f32 %v1363, %v1372
    %v1378 = vadd.f32 %v1364, %v1374
    %s1379 = sld [smem:[#allocation7 + $0x5e]]
    %v1380 = vstv %s1379
    %v1381 = vmul.f32 %v1380, %v1343
    %v1382 = vmul.f32 %v1380, %v1344
    %1385 = vrot.lane.b32.xlu0 %v1381, 125
    %v1386 = vpop.permute.xlu0 %1385
    %1387 = vrot.lane.b32.xlu0 %v1382, 125
    %v1388 = vpop.permute.xlu0 %1387
    %v1391 = vadd.f32 %v1377, %v1386
    %v1392 = vadd.f32 %v1378, %v1388
    %s1393 = sld [smem:[#allocation7 + $0x5f]]
    %v1394 = vstv %s1393
    %v1395 = vmul.f32 %v1394, %v1343
    %v1396 = vmul.f32 %v1394, %v1344
    %1399 = vrot.lane.b32.xlu0 %v1395, 124
    %v1400 = vpop.permute.xlu0 %1399
    %1401 = vrot.lane.b32.xlu0 %v1396, 124
    %v1402 = vpop.permute.xlu0 %1401
    %v1405 = vadd.f32 %v1391, %v1400
    %v1406 = vadd.f32 %v1392, %v1402
    %s1407 = sld [smem:[#allocation7 + $0x60]]
    %v1408 = vstv %s1407
    %v1409 = vmul.f32 %v1408, %v1343
    %v1410 = vmul.f32 %v1408, %v1344
    %1413 = vrot.lane.b32.xlu0 %v1409, 123
    %v1414 = vpop.permute.xlu0 %1413
    %1415 = vrot.lane.b32.xlu0 %v1410, 123
    %v1416 = vpop.permute.xlu0 %1415
    %v1419 = vadd.f32 %v1405, %v1414
    %v1420 = vadd.f32 %v1406, %v1416
    %s1421 = sld [smem:[#allocation7 + $0x61]]
    %v1422 = vstv %s1421
    %v1423 = vmul.f32 %v1422, %v1343
    %v1424 = vmul.f32 %v1422, %v1344
    %1427 = vrot.lane.b32.xlu0 %v1423, 122
    %v1428 = vpop.permute.xlu0 %1427
    %1429 = vrot.lane.b32.xlu0 %v1424, 122
    %v1430 = vpop.permute.xlu0 %1429
    %v1433 = vadd.f32 %v1419, %v1428
    %v1434 = vadd.f32 %v1420, %v1430
    %v1435 = vxor.u32 %v1433, 2147483648
    %v1436 = vxor.u32 %v1434, 2147483648
    %v1437 = vmul.f32 %v1435, 1.442695
    %v1438 = vpow.pop %v1437
    %v1439 = vmul.f32 %v1436, 1.442695
    %v1440 = vpow.pop %v1439
    %v1441 = vadd.f32 %v1438, 1.0
    %v1442 = vadd.f32 %v1440, 1.0
    %v1443 = vrcp.pop %v1441
    %v1444 = vmul.f32 1.0, %v1443
    %v1445 = vrcp.pop %v1442
    %v1446 = vmul.f32 1.0, %v1445
    %vm1447 = vcmask 130048
    %1448 = vst.msk [vmem:[#allocation8] sm:$0xff] %vm1447, %v1444
    %1449 = vst.msk [vmem:[#allocation8 + $0x8] sm:$0xff] %vm1447, %v1446
    %1452 = vrot.lane.b32.xlu0 %v1444, 106
    %v1453 = vpop.permute.xlu0 %1452
    %1454 = vrot.lane.b32.xlu0 %v1446, 106
    %v1455 = vpop.permute.xlu0 %1454
    %s1458 = scalar_lea.vmem [#allocation8], 16
    %1459 = vst.msk [vmem:[%s1458] sm:$0xff] %vm1447, %v1453
    %1460 = vst.msk [vmem:[%s1458 + $0x8] sm:$0xff] %vm1447, %v1455
    // Predicated region
    $region18: #{tpu_custom_call.1} parent=1 // pred_check
      _
    $region19: #{tpu_custom_call.1} parent=1 // pred_check_branch
      %1462 = sbr.rel (0) target = $region21
    $region20: #{tpu_custom_call.1} parent=1 // pred_region
      %s1464 = ssub.s32 512, 512
      %1465 = vsyncadd [#allocation5], %s1464
      %s1466 = sshll.u32 [#allocation8], 4
      %s1467 = int_to_ptr.vmem [resolvable:$true] %s1466
      %1472 = dma.vmem_to_hbm [thread:$0]  %s1467, 512, %s2, [#allocation5], 128, 128, 8
    $region21: #{tpu_custom_call.1} parent=1 // pred_fallthru
      _
    // Predicated region
    $region22: #{tpu_custom_call.1} parent=1 // pred_check
      _
    $region23: #{tpu_custom_call.1} parent=1 // pred_check_branch
      %1474 = sbr.rel (0) target = $region25
    $region24: #{tpu_custom_call.1} parent=1 // pred_region
      %1475 = dma.done [#allocation5], 512
    $region25: #{tpu_custom_call.1} parent=1 // pred_fallthru
      _
    %1476 = vsyncpa [#allocation4], 1
    %1477 = vsyncpa [#allocation5], 1
    %1478 = vsyncpa [#allocation6], 1

</llo_original>
